<compile_context>
chip_gen: v5e
topology: v5e:2x2
jax: 0.10.0
libtpu: 0.0.40
codegen_flags: <defaults>
</compile_context>

<pallas_src>
import functools
import math

import jax
import jax.numpy as jnp
from jax.experimental import pallas as pl
from jax.experimental.pallas import tpu as pltpu

LANE = 128
SUBLANE = 8
NOISE_DIM = 16
HID_DIM = 64


def _round_up(x, m):
    return ((x + m - 1) // m) * m


def _pad2(a, rows, cols):
    return jnp.pad(a, ((0, rows - a.shape[0]), (0, cols - a.shape[1])))


def _vmem_full(shape):
    nd = len(shape)
    return pl.BlockSpec(shape, lambda i, _nd=nd: (0,) * _nd)


# ----------------------------------------------------------------------------
# Single fused kernel
# ----------------------------------------------------------------------------
def fused_forward_kernel(
    # inputs (VMEM unless noted)
    x_ref, noise_ref, adj_ref, tmask_ref, valid_ref,
    gw1_ref, gb1_ref, gw2_ref, gb2_ref,          # generator MLP
    ew1_ref, eb1_ref, ew2_ref, eb2_ref,          # GCN encoder 1/2
    dw1_ref, db1_ref, dw2_ref, db2_ref,          # GCN decoder 1/2
    cw1_ref, cb1_ref, cw2_ref, cb2_ref,          # discriminator2 MLP
    alpha_ref,                                   # SMEM (4,): PReLU alphas
    scalars_ref,                                 # SMEM (2,): [1/len(idx_train), 1/n]
    # outputs
    emb_ref, logits_ref, lae_ref, lg_ref):
    f32 = jnp.float32
    bf16 = jnp.bfloat16
    npad = x_ref.shape[0]

    def dot(a, b):
        # Single-pass bf16 MXU matmul with f32 accumulation (perf review: the
        # kernel is a serial chain of small matmuls, so MXU pass count == latency).
        return jnp.dot(a.astype(bf16), b.astype(bf16), preferred_element_type=f32)

    def prelu(v, a):
        return jnp.where(v > 0.0, v, v * a)

    a_e1 = alpha_ref[0]
    a_e2 = alpha_ref[1]
    a_d1 = alpha_ref[2]
    a_d2 = alpha_ref[3]
    inv_train = scalars_ref[0]
    inv_n = scalars_ref[1]

    x = x_ref[...]                          # (NP, FP)  zero-padded lanes/rows
    adj = adj_ref[...].astype(bf16)         # (NP, NP)

    # ---- generator MLP: noise -> relu -> linear -----------------------------
    h = jnp.maximum(dot(noise_ref[...], gw1_ref[...]) + gb1_ref[...], 0.0)
    x_gen = dot(h, gw2_ref[...]) + gb2_ref[...]                 # (NP, FP)

    # ---- encoder: two GCN layers; real & generated halves reuse the same A --
    ew1 = ew1_ref[...].astype(bf16); eb1 = eb1_ref[...]
    ew2 = ew2_ref[...].astype(bf16); eb2 = eb2_ref[...]
    z_r = prelu(dot(adj, dot(x, ew1)) + eb1, a_e1)
    z_g = prelu(dot(adj, dot(x_gen, ew1)) + eb1, a_e1)
    z_r = prelu(dot(adj, dot(z_r, ew2)) + eb2, a_e2)            # (NP, HP)
    z_g = prelu(dot(adj, dot(z_g, ew2)) + eb2, a_e2)            # (NP, HP)
    emb_ref[0:npad, :] = z_r                # emb_all = [z ; z_gen], padded rows/lanes
    emb_ref[npad:2 * npad, :] = z_g

    # ---- decoder: two GCN layers on the real half (reference decodes z twice,
    #      identically; the duplicate is collapsed) ---------------------------
    d = prelu(dot(adj, dot(z_r, dw1_ref[...])) + db1_ref[...], a_d1)
    z_dec = prelu(dot(adj, dot(d, dw2_ref[...])) + db2_ref[...], a_d2)   # (NP, FP)

    # ---- discriminator2 MLP (sigmoid hidden + final sigmoid), per half ------
    cw1 = cw1_ref[...].astype(bf16); cb1 = cb1_ref[...]
    cw2 = cw2_ref[...].astype(bf16); cb2 = cb2_ref[...]
    log_r = jax.nn.sigmoid(dot(jax.nn.sigmoid(dot(z_r, cw1) + cb1), cw2) + cb2)
    log_g = jax.nn.sigmoid(dot(jax.nn.sigmoid(dot(z_g, cw1) + cb1), cw2) + cb2)
    logits_ref[0:npad, :] = log_r
    logits_ref[npad:2 * npad, :] = log_g
    # logits_gen == logits[npad:, 0:1]  -> no second discriminator pass needed.

    # ---- loss_g = BCE(logits_gen[:,0], 0) = mean(-clamp(log(1-p), -100)) -----
    p_gen = log_g[:, 0:1]                                       # lane 0 only
    neg_log = -jnp.maximum(jnp.log(1.0 - p_gen), -100.0)        # p==1 -> 100
    lg_ref[...] = jnp.sum(neg_log * valid_ref[...], axis=0, keepdims=True) * inv_n

    # ---- loss_ae = mean over train rows of sqrt(sum_f (x - z_dec)^2) ---------
    diff = x - z_dec                                            # padded lanes are 0
    row = jnp.sqrt(jnp.sum(diff * diff, axis=1, keepdims=True))
    lae_ref[...] = jnp.sum(row * tmask_ref[...], axis=0, keepdims=True) * inv_train


def fused_forward(pp, x_p, A_p, noise_p, train_mask, valid, scalars):
    NP, _ = x_p.shape
    HP = pp["ew1"].shape[1]
    LP = pp["cw2"].shape[1]

    inputs = (x_p, noise_p, A_p, train_mask, valid,
              pp["gw1"], pp["gb1"], pp["gw2"], pp["gb2"],
              pp["ew1"], pp["eb1"], pp["ew2"], pp["eb2"],
              pp["dw1"], pp["db1"], pp["dw2"], pp["db2"],
              pp["cw1"], pp["cb1"], pp["cw2"], pp["cb2"],
              pp["alphas"], scalars)

    in_specs = [_vmem_full(a.shape) for a in inputs[:-2]]
    in_specs += [pl.BlockSpec(memory_space=pltpu.MemorySpace.SMEM)] * 2  # alphas, scalars

    emb_p, logits_p, lae, lg = pl.pallas_call(
        fused_forward_kernel,
        out_shape=(
            jax.ShapeDtypeStruct((2 * NP, HP), jnp.float32),   # emb_all (padded)
            jax.ShapeDtypeStruct((2 * NP, LP), jnp.float32),   # logits (lane-padded)
            jax.ShapeDtypeStruct((1, 1), jnp.float32),         # loss_ae
            jax.ShapeDtypeStruct((1, 1), jnp.float32),         # loss_g
        ),
        grid=(1,),
        in_specs=in_specs,
        out_specs=(
            _vmem_full((2 * NP, HP)),
            _vmem_full((2 * NP, LP)),
            _vmem_full((1, 1)),
            _vmem_full((1, 1)),
        ),
        compiler_params=pltpu.CompilerParams(
            dimension_semantics=("arbitrary",),
            vmem_limit_bytes=32 * 1024 * 1024),
        # TODO(synk): for multi-graph / multi-noise batches add a leading
        # "parallel" grid axis (2 TCs on v7x); for non-toy N, tile A over row
        # blocks with a (rows "parallel", contraction "arbitrary") grid instead
        # of the all-resident design.
    )(*inputs)
    return emb_p, logits_p, lae[0, 0], lg[0, 0]


# ----------------------------------------------------------------------------
# Parameter init + one-time lane-padding (hoisted out of the per-call path)
# ----------------------------------------------------------------------------
def _xavier(key, shape):
    fan_in, fan_out = shape
    bound = math.sqrt(6.0 / (fan_in + fan_out))
    return jax.random.uniform(key, shape, jnp.float32, -bound, bound)


def init_params(key, n_in, n_h, noise_dim=NOISE_DIM, hid_dim=HID_DIM):
    keys = jax.random.split(key, 8)
    p = {}
    # GCN: weight stored (in, out) so kernel computes x @ W ; bias 0 ; PReLU alpha 0.25
    p["gcn_enc1"] = dict(w=_xavier(keys[0], (n_in, n_h)), b=jnp.zeros((n_h,), jnp.float32),
                         alpha=jnp.float32(0.25))
    p["gcn_enc2"] = dict(w=_xavier(keys[1], (n_h, n_h)), b=jnp.zeros((n_h,), jnp.float32),
                         alpha=jnp.float32(0.25))
    p["gcn_dec1"] = dict(w=_xavier(keys[2], (n_h, n_h)), b=jnp.zeros((n_h,), jnp.float32),
                         alpha=jnp.float32(0.25))
    p["gcn_dec2"] = dict(w=_xavier(keys[3], (n_h, n_in)), b=jnp.zeros((n_in,), jnp.float32),
                         alpha=jnp.float32(0.25))
    # generator MLP: noise_dim -> hid_dim -> n_in (relu hidden)
    # TODO(synk): torch_geometric-style MLP norm layers are not modeled (plain Linear stack).
    p["gen"] = dict(w1=_xavier(keys[4], (noise_dim, hid_dim)), b1=jnp.zeros((hid_dim,), jnp.float32),
                    w2=_xavier(keys[5], (hid_dim, n_in)), b2=jnp.zeros((n_in,), jnp.float32))
    # discriminator2 MLP: n_h -> hid_dim -> 1 (sigmoid hidden)
    p["disc2"] = dict(w1=_xavier(keys[6], (n_h, hid_dim)), b1=jnp.zeros((hid_dim,), jnp.float32),
                      w2=_xavier(keys[7], (hid_dim, 1)), b2=jnp.zeros((1,), jnp.float32))
    return p


def prepare_padded_params(params):
    """Pad all weights/biases to lane-dense shapes ONCE (not per forward call)."""
    n_in, n_h = params["gcn_enc1"]["w"].shape
    noise_dim, hid_dim = params["gen"]["w1"].shape
    FP = _round_up(n_in, LANE)
    HP = _round_up(n_h, LANE)
    NDP = _round_up(noise_dim, LANE)
    HIDP = _round_up(hid_dim, LANE)
    LP = LANE

    g = params["gen"]
    e1, e2 = params["gcn_enc1"], params["gcn_enc2"]
    d1, d2 = params["gcn_dec1"], params["gcn_dec2"]
    c = params["disc2"]

    pp = dict(
        gw1=_pad2(g["w1"], NDP, HIDP), gb1=_pad2(g["b1"].reshape(1, -1), 1, HIDP),
        gw2=_pad2(g["w2"], HIDP, FP),  gb2=_pad2(g["b2"].reshape(1, -1), 1, FP),
        ew1=_pad2(e1["w"], FP, HP),    eb1=_pad2(e1["b"].reshape(1, -1), 1, HP),
        ew2=_pad2(e2["w"], HP, HP),    eb2=_pad2(e2["b"].reshape(1, -1), 1, HP),
        dw1=_pad2(d1["w"], HP, HP),    db1=_pad2(d1["b"].reshape(1, -1), 1, HP),
        dw2=_pad2(d2["w"], HP, FP),    db2=_pad2(d2["b"].reshape(1, -1), 1, FP),
        cw1=_pad2(c["w1"], HP, HIDP),  cb1=_pad2(c["b1"].reshape(1, -1), 1, HIDP),
        cw2=_pad2(c["w2"], HIDP, LP),  cb2=_pad2(c["b2"].reshape(1, -1), 1, LP),
        alphas=jnp.stack([e1["alpha"], e2["alpha"],
                          d1["alpha"], d2["alpha"]]).astype(jnp.float32),
    )
    return pp


# ----------------------------------------------------------------------------
# Model forward (mirrors Model.forward -> model_enc); everything hot in 1 kernel.
# ----------------------------------------------------------------------------
@functools.partial(jax.jit, static_argnames=("n_h",))
def model_forward(padded_params, seq1, adj, idx_train, idx_test, noise_key, *, n_h):
    x = jnp.squeeze(seq1).astype(jnp.float32)        # (N, n_in)
    A = jnp.squeeze(adj).astype(jnp.float32)         # (N, N)
    n, n_in = x.shape
    NP = _round_up(n, SUBLANE)                       # sublane-aligned node count
    FP = _round_up(n_in, LANE)
    NDP = _round_up(NOISE_DIM, LANE)

    noise = jax.random.normal(noise_key, (n, NOISE_DIM), jnp.float32)   # torch.randn

    x_p = _pad2(x, NP, FP)
    A_p = _pad2(A, NP, NP)
    noise_p = _pad2(noise, NP, NDP)
    train_mask = jnp.zeros((NP, 1), jnp.float32).at[idx_train, 0].set(1.0)
    valid = _pad2(jnp.ones((n, 1), jnp.float32), NP, 1)      # masks padded rows in loss_g
    scalars = jnp.array([1.0 / idx_train.shape[0], 1.0 / n], jnp.float32)

    emb_p, logits_p, loss_ae, loss_g = fused_forward(
        padded_params, x_p, A_p, noise_p, train_mask, valid, scalars)

    emb_all = jnp.concatenate([emb_p[:n, :n_h], emb_p[NP:NP + n, :n_h]], axis=0)
    logits = jnp.concatenate([logits_p[:n, 0:1], logits_p[NP:NP + n, 0:1]], axis=0)
    score = jnp.take(logits, idx_test, axis=0)        # logits[idx_test, :]
    # TODO(synk): loss_dis is computed in model_enc but discarded by Model.forward;
    # the reference forward returns loss_ae twice, which is reproduced here.
    return loss_ae, loss_g, loss_ae, score, emb_all


# ----------------------------------------------------------------------------
if __name__ == "__main__":
    N, N_IN, N_H = 16, 32, 64

    key = jax.random.PRNGKey(0)
    k_params, k_x, k_adj, k_noise = jax.random.split(key, 4)

    params = init_params(k_params, N_IN, N_H)
    padded_params = prepare_padded_params(params)     # one-time padding

    seq1 = jax.random.normal(k_x, (1, N, N_IN), jnp.float32)
    # simple symmetric row-normalized adjacency with self loops
    raw = (jax.random.uniform(k_adj, (N, N)) > 0.7).astype(jnp.float32)
    adj_dense = jnp.clip(raw + raw.T + jnp.eye(N, dtype=jnp.float32), 0.0, 1.0)
    adj_dense = adj_dense / jnp.sum(adj_dense, axis=1, keepdims=True)
    adj = adj_dense[None]                              # (1, N, N)

    idx_train = jnp.arange(0, 8, dtype=jnp.int32)
    idx_test = jnp.arange(8, 16, dtype=jnp.int32)

    loss_ae, loss_g, _, score, emb_all = model_forward(
        padded_params, seq1, adj, idx_train, idx_test, k_noise, n_h=N_H)
    jax.block_until_ready((loss_ae, loss_g, score, emb_all))

    assert score.shape == (8, 1)
    assert emb_all.shape == (2 * N, N_H)
    assert jnp.isfinite(loss_ae) and jnp.isfinite(loss_g)
    print("KERNEL_OK")
</pallas_src>

<mosaic_0001>
module attributes {stable_mosaic.version = 11 : i64} {
  func.func @fused_forward_kernel(%arg0: i32, %arg1: memref<16x128xf32, #tpu.memory_space<vmem>>, %arg2: memref<16x128xf32, #tpu.memory_space<vmem>>, %arg3: memref<16x16xf32, #tpu.memory_space<vmem>>, %arg4: memref<16x1xf32, #tpu.memory_space<vmem>>, %arg5: memref<16x1xf32, #tpu.memory_space<vmem>>, %arg6: memref<128x128xf32, #tpu.memory_space<vmem>>, %arg7: memref<1x128xf32, #tpu.memory_space<vmem>>, %arg8: memref<128x128xf32, #tpu.memory_space<vmem>>, %arg9: memref<1x128xf32, #tpu.memory_space<vmem>>, %arg10: memref<128x128xf32, #tpu.memory_space<vmem>>, %arg11: memref<1x128xf32, #tpu.memory_space<vmem>>, %arg12: memref<128x128xf32, #tpu.memory_space<vmem>>, %arg13: memref<1x128xf32, #tpu.memory_space<vmem>>, %arg14: memref<128x128xf32, #tpu.memory_space<vmem>>, %arg15: memref<1x128xf32, #tpu.memory_space<vmem>>, %arg16: memref<128x128xf32, #tpu.memory_space<vmem>>, %arg17: memref<1x128xf32, #tpu.memory_space<vmem>>, %arg18: memref<128x128xf32, #tpu.memory_space<vmem>>, %arg19: memref<1x128xf32, #tpu.memory_space<vmem>>, %arg20: memref<128x128xf32, #tpu.memory_space<vmem>>, %arg21: memref<1x128xf32, #tpu.memory_space<vmem>>, %arg22: memref<4xf32, #tpu.memory_space<smem>>, %arg23: memref<2xf32, #tpu.memory_space<smem>>, %arg24: memref<32x128xf32, #tpu.memory_space<vmem>>, %arg25: memref<32x128xf32, #tpu.memory_space<vmem>>, %arg26: memref<1x1xf32, #tpu.memory_space<vmem>>, %arg27: memref<1x1xf32, #tpu.memory_space<vmem>>) attributes {dimension_semantics = [#tpu.dimension_semantics<arbitrary>], iteration_bounds = array<i64: 1>, scalar_prefetch = 0 : i64, scratch_operands = 0 : i64, tpu.core_type = #tpu.core_type<tc>, window_params = [{pipeline_mode = #tpu.pipeline_mode<synchronous>, transform_indices = @transform_0, window_bounds = array<i64: 16, 128>}, {pipeline_mode = #tpu.pipeline_mode<synchronous>, transform_indices = @transform_1, window_bounds = array<i64: 16, 128>}, {pipeline_mode = #tpu.pipeline_mode<synchronous>, transform_indices = @transform_2, window_bounds = array<i64: 16, 16>}, {pipeline_mode = #tpu.pipeline_mode<synchronous>, transform_indices = @transform_3, window_bounds = array<i64: 16, 1>}, {pipeline_mode = #tpu.pipeline_mode<synchronous>, transform_indices = @transform_4, window_bounds = array<i64: 16, 1>}, {pipeline_mode = #tpu.pipeline_mode<synchronous>, transform_indices = @transform_5, window_bounds = array<i64: 128, 128>}, {pipeline_mode = #tpu.pipeline_mode<synchronous>, transform_indices = @transform_6, window_bounds = array<i64: 1, 128>}, {pipeline_mode = #tpu.pipeline_mode<synchronous>, transform_indices = @transform_7, window_bounds = array<i64: 128, 128>}, {pipeline_mode = #tpu.pipeline_mode<synchronous>, transform_indices = @transform_8, window_bounds = array<i64: 1, 128>}, {pipeline_mode = #tpu.pipeline_mode<synchronous>, transform_indices = @transform_9, window_bounds = array<i64: 128, 128>}, {pipeline_mode = #tpu.pipeline_mode<synchronous>, transform_indices = @transform_10, window_bounds = array<i64: 1, 128>}, {pipeline_mode = #tpu.pipeline_mode<synchronous>, transform_indices = @transform_11, window_bounds = array<i64: 128, 128>}, {pipeline_mode = #tpu.pipeline_mode<synchronous>, transform_indices = @transform_12, window_bounds = array<i64: 1, 128>}, {pipeline_mode = #tpu.pipeline_mode<synchronous>, transform_indices = @transform_13, window_bounds = array<i64: 128, 128>}, {pipeline_mode = #tpu.pipeline_mode<synchronous>, transform_indices = @transform_14, window_bounds = array<i64: 1, 128>}, {pipeline_mode = #tpu.pipeline_mode<synchronous>, transform_indices = @transform_15, window_bounds = array<i64: 128, 128>}, {pipeline_mode = #tpu.pipeline_mode<synchronous>, transform_indices = @transform_16, window_bounds = array<i64: 1, 128>}, {pipeline_mode = #tpu.pipeline_mode<synchronous>, transform_indices = @transform_17, window_bounds = array<i64: 128, 128>}, {pipeline_mode = #tpu.pipeline_mode<synchronous>, transform_indices = @transform_18, window_bounds = array<i64: 1, 128>}, {pipeline_mode = #tpu.pipeline_mode<synchronous>, transform_indices = @transform_19, window_bounds = array<i64: 128, 128>}, {pipeline_mode = #tpu.pipeline_mode<synchronous>, transform_indices = @transform_20, window_bounds = array<i64: 1, 128>}, {transform_indices = @transform_21, window_bounds = array<i64: 4>}, {transform_indices = @transform_22, window_bounds = array<i64: 2>}, {pipeline_mode = #tpu.pipeline_mode<synchronous>, transform_indices = @transform_23, window_bounds = array<i64: 32, 128>}, {pipeline_mode = #tpu.pipeline_mode<synchronous>, transform_indices = @transform_24, window_bounds = array<i64: 32, 128>}, {pipeline_mode = #tpu.pipeline_mode<synchronous>, transform_indices = @transform_25, window_bounds = array<i64: 1, 1>}, {pipeline_mode = #tpu.pipeline_mode<synchronous>, transform_indices = @transform_26, window_bounds = array<i64: 1, 1>}]} {
    %c0 = arith.constant 0 : index
    %0 = memref.load %arg22[%c0] : memref<4xf32, #tpu.memory_space<smem>>
    %c1 = arith.constant 1 : index
    %1 = memref.load %arg22[%c1] : memref<4xf32, #tpu.memory_space<smem>>
    %c2 = arith.constant 2 : index
    %2 = memref.load %arg22[%c2] : memref<4xf32, #tpu.memory_space<smem>>
    %c3 = arith.constant 3 : index
    %3 = memref.load %arg22[%c3] : memref<4xf32, #tpu.memory_space<smem>>
    %c0_0 = arith.constant 0 : index
    %4 = memref.load %arg23[%c0_0] : memref<2xf32, #tpu.memory_space<smem>>
    %c1_1 = arith.constant 1 : index
    %5 = memref.load %arg23[%c1_1] : memref<2xf32, #tpu.memory_space<smem>>
    %c0_2 = arith.constant 0 : index
    %c0_3 = arith.constant 0 : index
    %6 = vector.load %arg1[%c0_2, %c0_3] : memref<16x128xf32, #tpu.memory_space<vmem>>, vector<16x128xf32>
    %c0_4 = arith.constant 0 : index
    %c0_5 = arith.constant 0 : index
    %7 = vector.load %arg3[%c0_4, %c0_5] : memref<16x16xf32, #tpu.memory_space<vmem>>, vector<16x16xf32>
    %8 = arith.truncf %7 : vector<16x16xf32> to vector<16x16xbf16>
    %c0_6 = arith.constant 0 : index
    %c0_7 = arith.constant 0 : index
    %9 = vector.load %arg2[%c0_6, %c0_7] : memref<16x128xf32, #tpu.memory_space<vmem>>, vector<16x128xf32>
    %c0_8 = arith.constant 0 : index
    %c0_9 = arith.constant 0 : index
    %10 = vector.load %arg6[%c0_8, %c0_9] : memref<128x128xf32, #tpu.memory_space<vmem>>, vector<128x128xf32>
    %11 = arith.truncf %9 : vector<16x128xf32> to vector<16x128xbf16>
    %12 = arith.truncf %10 : vector<128x128xf32> to vector<128x128xbf16>
    %cst = arith.constant dense<0.000000e+00> : vector<16x128xf32>
    %13 = tpu.matmul %11, %12, %cst {dimension_numbers = #tpu.dot_dimension_numbers<[1], [0], [0], [1], [0, 0, 1, 1], [], []>} : vector<16x128xbf16>, vector<128x128xbf16>, vector<16x128xf32> -> vector<16x128xf32>
    %c0_10 = arith.constant 0 : index
    %c0_11 = arith.constant 0 : index
    %14 = vector.load %arg7[%c0_10, %c0_11] : memref<1x128xf32, #tpu.memory_space<vmem>>, vector<1x128xf32>
    %15 = vector.broadcast %14 : vector<1x128xf32> to vector<16x128xf32>
    %16 = arith.addf %13, %15 : vector<16x128xf32>
    %cst_12 = arith.constant 0.000000e+00 : f32
    %17 = vector.broadcast %cst_12 : f32 to vector<16x128xf32>
    %18 = arith.maximumf %16, %17 : vector<16x128xf32>
    %c0_13 = arith.constant 0 : index
    %c0_14 = arith.constant 0 : index
    %19 = vector.load %arg8[%c0_13, %c0_14] : memref<128x128xf32, #tpu.memory_space<vmem>>, vector<128x128xf32>
    %20 = arith.truncf %18 : vector<16x128xf32> to vector<16x128xbf16>
    %21 = arith.truncf %19 : vector<128x128xf32> to vector<128x128xbf16>
    %cst_15 = arith.constant dense<0.000000e+00> : vector<16x128xf32>
    %22 = tpu.matmul %20, %21, %cst_15 {dimension_numbers = #tpu.dot_dimension_numbers<[1], [0], [0], [1], [0, 0, 1, 1], [], []>} : vector<16x128xbf16>, vector<128x128xbf16>, vector<16x128xf32> -> vector<16x128xf32>
    %c0_16 = arith.constant 0 : index
    %c0_17 = arith.constant 0 : index
    %23 = vector.load %arg9[%c0_16, %c0_17] : memref<1x128xf32, #tpu.memory_space<vmem>>, vector<1x128xf32>
    %24 = vector.broadcast %23 : vector<1x128xf32> to vector<16x128xf32>
    %25 = arith.addf %22, %24 : vector<16x128xf32>
    %c0_18 = arith.constant 0 : index
    %c0_19 = arith.constant 0 : index
    %26 = vector.load %arg10[%c0_18, %c0_19] : memref<128x128xf32, #tpu.memory_space<vmem>>, vector<128x128xf32>
    %27 = arith.truncf %26 : vector<128x128xf32> to vector<128x128xbf16>
    %c0_20 = arith.constant 0 : index
    %c0_21 = arith.constant 0 : index
    %28 = vector.load %arg11[%c0_20, %c0_21] : memref<1x128xf32, #tpu.memory_space<vmem>>, vector<1x128xf32>
    %c0_22 = arith.constant 0 : index
    %c0_23 = arith.constant 0 : index
    %29 = vector.load %arg12[%c0_22, %c0_23] : memref<128x128xf32, #tpu.memory_space<vmem>>, vector<128x128xf32>
    %30 = arith.truncf %29 : vector<128x128xf32> to vector<128x128xbf16>
    %c0_24 = arith.constant 0 : index
    %c0_25 = arith.constant 0 : index
    %31 = vector.load %arg13[%c0_24, %c0_25] : memref<1x128xf32, #tpu.memory_space<vmem>>, vector<1x128xf32>
    %32 = arith.truncf %6 : vector<16x128xf32> to vector<16x128xbf16>
    %cst_26 = arith.constant dense<0.000000e+00> : vector<16x128xf32>
    %33 = tpu.matmul %32, %27, %cst_26 {dimension_numbers = #tpu.dot_dimension_numbers<[1], [0], [0], [1], [0, 0, 1, 1], [], []>} : vector<16x128xbf16>, vector<128x128xbf16>, vector<16x128xf32> -> vector<16x128xf32>
    %34 = arith.truncf %33 : vector<16x128xf32> to vector<16x128xbf16>
    %cst_27 = arith.constant dense<0.000000e+00> : vector<16x128xf32>
    %35 = tpu.matmul %8, %34, %cst_27 {dimension_numbers = #tpu.dot_dimension_numbers<[1], [0], [0], [1], [0, 0, 1, 1], [], []>} : vector<16x16xbf16>, vector<16x128xbf16>, vector<16x128xf32> -> vector<16x128xf32>
    %36 = vector.broadcast %28 : vector<1x128xf32> to vector<16x128xf32>
    %37 = arith.addf %35, %36 : vector<16x128xf32>
    %cst_28 = arith.constant 0.000000e+00 : f32
    %38 = vector.broadcast %cst_28 : f32 to vector<16x128xf32>
    %39 = arith.cmpf ogt, %37, %38 : vector<16x128xf32>
    %40 = vector.broadcast %0 : f32 to vector<16x128xf32>
    %41 = arith.mulf %37, %40 : vector<16x128xf32>
    %42 = arith.select %39, %37, %41 : vector<16x128xi1>, vector<16x128xf32>
    %43 = arith.truncf %25 : vector<16x128xf32> to vector<16x128xbf16>
    %cst_29 = arith.constant dense<0.000000e+00> : vector<16x128xf32>
    %44 = tpu.matmul %43, %27, %cst_29 {dimension_numbers = #tpu.dot_dimension_numbers<[1], [0], [0], [1], [0, 0, 1, 1], [], []>} : vector<16x128xbf16>, vector<128x128xbf16>, vector<16x128xf32> -> vector<16x128xf32>
    %45 = arith.truncf %44 : vector<16x128xf32> to vector<16x128xbf16>
    %cst_30 = arith.constant dense<0.000000e+00> : vector<16x128xf32>
    %46 = tpu.matmul %8, %45, %cst_30 {dimension_numbers = #tpu.dot_dimension_numbers<[1], [0], [0], [1], [0, 0, 1, 1], [], []>} : vector<16x16xbf16>, vector<16x128xbf16>, vector<16x128xf32> -> vector<16x128xf32>
    %47 = vector.broadcast %28 : vector<1x128xf32> to vector<16x128xf32>
    %48 = arith.addf %46, %47 : vector<16x128xf32>
    %cst_31 = arith.constant 0.000000e+00 : f32
    %49 = vector.broadcast %cst_31 : f32 to vector<16x128xf32>
    %50 = arith.cmpf ogt, %48, %49 : vector<16x128xf32>
    %51 = vector.broadcast %0 : f32 to vector<16x128xf32>
    %52 = arith.mulf %48, %51 : vector<16x128xf32>
    %53 = arith.select %50, %48, %52 : vector<16x128xi1>, vector<16x128xf32>
    %54 = arith.truncf %42 : vector<16x128xf32> to vector<16x128xbf16>
    %cst_32 = arith.constant dense<0.000000e+00> : vector<16x128xf32>
    %55 = tpu.matmul %54, %30, %cst_32 {dimension_numbers = #tpu.dot_dimension_numbers<[1], [0], [0], [1], [0, 0, 1, 1], [], []>} : vector<16x128xbf16>, vector<128x128xbf16>, vector<16x128xf32> -> vector<16x128xf32>
    %56 = arith.truncf %55 : vector<16x128xf32> to vector<16x128xbf16>
    %cst_33 = arith.constant dense<0.000000e+00> : vector<16x128xf32>
    %57 = tpu.matmul %8, %56, %cst_33 {dimension_numbers = #tpu.dot_dimension_numbers<[1], [0], [0], [1], [0, 0, 1, 1], [], []>} : vector<16x16xbf16>, vector<16x128xbf16>, vector<16x128xf32> -> vector<16x128xf32>
    %58 = vector.broadcast %31 : vector<1x128xf32> to vector<16x128xf32>
    %59 = arith.addf %57, %58 : vector<16x128xf32>
    %cst_34 = arith.constant 0.000000e+00 : f32
    %60 = vector.broadcast %cst_34 : f32 to vector<16x128xf32>
    %61 = arith.cmpf ogt, %59, %60 : vector<16x128xf32>
    %62 = vector.broadcast %1 : f32 to vector<16x128xf32>
    %63 = arith.mulf %59, %62 : vector<16x128xf32>
    %64 = arith.select %61, %59, %63 : vector<16x128xi1>, vector<16x128xf32>
    %65 = arith.truncf %53 : vector<16x128xf32> to vector<16x128xbf16>
    %cst_35 = arith.constant dense<0.000000e+00> : vector<16x128xf32>
    %66 = tpu.matmul %65, %30, %cst_35 {dimension_numbers = #tpu.dot_dimension_numbers<[1], [0], [0], [1], [0, 0, 1, 1], [], []>} : vector<16x128xbf16>, vector<128x128xbf16>, vector<16x128xf32> -> vector<16x128xf32>
    %67 = arith.truncf %66 : vector<16x128xf32> to vector<16x128xbf16>
    %cst_36 = arith.constant dense<0.000000e+00> : vector<16x128xf32>
    %68 = tpu.matmul %8, %67, %cst_36 {dimension_numbers = #tpu.dot_dimension_numbers<[1], [0], [0], [1], [0, 0, 1, 1], [], []>} : vector<16x16xbf16>, vector<16x128xbf16>, vector<16x128xf32> -> vector<16x128xf32>
    %69 = vector.broadcast %31 : vector<1x128xf32> to vector<16x128xf32>
    %70 = arith.addf %68, %69 : vector<16x128xf32>
    %cst_37 = arith.constant 0.000000e+00 : f32
    %71 = vector.broadcast %cst_37 : f32 to vector<16x128xf32>
    %72 = arith.cmpf ogt, %70, %71 : vector<16x128xf32>
    %73 = vector.broadcast %1 : f32 to vector<16x128xf32>
    %74 = arith.mulf %70, %73 : vector<16x128xf32>
    %75 = arith.select %72, %70, %74 : vector<16x128xi1>, vector<16x128xf32>
    %c0_38 = arith.constant 0 : index
    %c0_39 = arith.constant 0 : index
    %76 = vector.load %arg24[%c0_38, %c0_39] : memref<32x128xf32, #tpu.memory_space<vmem>>, vector<16x128xf32>
    tpu.vector_store %arg24[%c0_38, %c0_39], %64 {strides = array<i32>} : memref<32x128xf32, #tpu.memory_space<vmem>>, vector<16x128xf32>,
    %c16 = arith.constant 16 : index
    %c0_40 = arith.constant 0 : index
    %77 = vector.load %arg24[%c16, %c0_40] : memref<32x128xf32, #tpu.memory_space<vmem>>, vector<16x128xf32>
    tpu.vector_store %arg24[%c16, %c0_40], %75 {strides = array<i32>} : memref<32x128xf32, #tpu.memory_space<vmem>>, vector<16x128xf32>,
    %c0_41 = arith.constant 0 : index
    %c0_42 = arith.constant 0 : index
    %78 = vector.load %arg14[%c0_41, %c0_42] : memref<128x128xf32, #tpu.memory_space<vmem>>, vector<128x128xf32>
    %79 = arith.truncf %64 : vector<16x128xf32> to vector<16x128xbf16>
    %80 = arith.truncf %78 : vector<128x128xf32> to vector<128x128xbf16>
    %cst_43 = arith.constant dense<0.000000e+00> : vector<16x128xf32>
    %81 = tpu.matmul %79, %80, %cst_43 {dimension_numbers = #tpu.dot_dimension_numbers<[1], [0], [0], [1], [0, 0, 1, 1], [], []>} : vector<16x128xbf16>, vector<128x128xbf16>, vector<16x128xf32> -> vector<16x128xf32>
    %82 = arith.truncf %81 : vector<16x128xf32> to vector<16x128xbf16>
    %cst_44 = arith.constant dense<0.000000e+00> : vector<16x128xf32>
    %83 = tpu.matmul %8, %82, %cst_44 {dimension_numbers = #tpu.dot_dimension_numbers<[1], [0], [0], [1], [0, 0, 1, 1], [], []>} : vector<16x16xbf16>, vector<16x128xbf16>, vector<16x128xf32> -> vector<16x128xf32>
    %c0_45 = arith.constant 0 : index
    %c0_46 = arith.constant 0 : index
    %84 = vector.load %arg15[%c0_45, %c0_46] : memref<1x128xf32, #tpu.memory_space<vmem>>, vector<1x128xf32>
    %85 = vector.broadcast %84 : vector<1x128xf32> to vector<16x128xf32>
    %86 = arith.addf %83, %85 : vector<16x128xf32>
    %cst_47 = arith.constant 0.000000e+00 : f32
    %87 = vector.broadcast %cst_47 : f32 to vector<16x128xf32>
    %88 = arith.cmpf ogt, %86, %87 : vector<16x128xf32>
    %89 = vector.broadcast %2 : f32 to vector<16x128xf32>
    %90 = arith.mulf %86, %89 : vector<16x128xf32>
    %91 = arith.select %88, %86, %90 : vector<16x128xi1>, vector<16x128xf32>
    %c0_48 = arith.constant 0 : index
    %c0_49 = arith.constant 0 : index
    %92 = vector.load %arg16[%c0_48, %c0_49] : memref<128x128xf32, #tpu.memory_space<vmem>>, vector<128x128xf32>
    %93 = arith.truncf %91 : vector<16x128xf32> to vector<16x128xbf16>
    %94 = arith.truncf %92 : vector<128x128xf32> to vector<128x128xbf16>
    %cst_50 = arith.constant dense<0.000000e+00> : vector<16x128xf32>
    %95 = tpu.matmul %93, %94, %cst_50 {dimension_numbers = #tpu.dot_dimension_numbers<[1], [0], [0], [1], [0, 0, 1, 1], [], []>} : vector<16x128xbf16>, vector<128x128xbf16>, vector<16x128xf32> -> vector<16x128xf32>
    %96 = arith.truncf %95 : vector<16x128xf32> to vector<16x128xbf16>
    %cst_51 = arith.constant dense<0.000000e+00> : vector<16x128xf32>
    %97 = tpu.matmul %8, %96, %cst_51 {dimension_numbers = #tpu.dot_dimension_numbers<[1], [0], [0], [1], [0, 0, 1, 1], [], []>} : vector<16x16xbf16>, vector<16x128xbf16>, vector<16x128xf32> -> vector<16x128xf32>
    %c0_52 = arith.constant 0 : index
    %c0_53 = arith.constant 0 : index
    %98 = vector.load %arg17[%c0_52, %c0_53] : memref<1x128xf32, #tpu.memory_space<vmem>>, vector<1x128xf32>
    %99 = vector.broadcast %98 : vector<1x128xf32> to vector<16x128xf32>
    %100 = arith.addf %97, %99 : vector<16x128xf32>
    %cst_54 = arith.constant 0.000000e+00 : f32
    %101 = vector.broadcast %cst_54 : f32 to vector<16x128xf32>
    %102 = arith.cmpf ogt, %100, %101 : vector<16x128xf32>
    %103 = vector.broadcast %3 : f32 to vector<16x128xf32>
    %104 = arith.mulf %100, %103 : vector<16x128xf32>
    %105 = arith.select %102, %100, %104 : vector<16x128xi1>, vector<16x128xf32>
    %c0_55 = arith.constant 0 : index
    %c0_56 = arith.constant 0 : index
    %106 = vector.load %arg18[%c0_55, %c0_56] : memref<128x128xf32, #tpu.memory_space<vmem>>, vector<128x128xf32>
    %107 = arith.truncf %106 : vector<128x128xf32> to vector<128x128xbf16>
    %c0_57 = arith.constant 0 : index
    %c0_58 = arith.constant 0 : index
    %108 = vector.load %arg19[%c0_57, %c0_58] : memref<1x128xf32, #tpu.memory_space<vmem>>, vector<1x128xf32>
    %c0_59 = arith.constant 0 : index
    %c0_60 = arith.constant 0 : index
    %109 = vector.load %arg20[%c0_59, %c0_60] : memref<128x128xf32, #tpu.memory_space<vmem>>, vector<128x128xf32>
    %110 = arith.truncf %109 : vector<128x128xf32> to vector<128x128xbf16>
    %c0_61 = arith.constant 0 : index
    %c0_62 = arith.constant 0 : index
    %111 = vector.load %arg21[%c0_61, %c0_62] : memref<1x128xf32, #tpu.memory_space<vmem>>, vector<1x128xf32>
    %112 = arith.truncf %64 : vector<16x128xf32> to vector<16x128xbf16>
    %cst_63 = arith.constant dense<0.000000e+00> : vector<16x128xf32>
    %113 = tpu.matmul %112, %107, %cst_63 {dimension_numbers = #tpu.dot_dimension_numbers<[1], [0], [0], [1], [0, 0, 1, 1], [], []>} : vector<16x128xbf16>, vector<128x128xbf16>, vector<16x128xf32> -> vector<16x128xf32>
    %114 = vector.broadcast %108 : vector<1x128xf32> to vector<16x128xf32>
    %115 = arith.addf %113, %114 : vector<16x128xf32>
    %116 = arith.negf %115 : vector<16x128xf32>
    %117 = math.exp %116 : vector<16x128xf32>
    %cst_64 = arith.constant 1.000000e+00 : f32
    %118 = vector.broadcast %cst_64 : f32 to vector<16x128xf32>
    %119 = arith.addf %118, %117 : vector<16x128xf32>
    %120 = arith.divf %118, %119 : vector<16x128xf32>
    %121 = arith.truncf %120 : vector<16x128xf32> to vector<16x128xbf16>
    %cst_65 = arith.constant dense<0.000000e+00> : vector<16x128xf32>
    %122 = tpu.matmul %121, %110, %cst_65 {dimension_numbers = #tpu.dot_dimension_numbers<[1], [0], [0], [1], [0, 0, 1, 1], [], []>} : vector<16x128xbf16>, vector<128x128xbf16>, vector<16x128xf32> -> vector<16x128xf32>
    %123 = vector.broadcast %111 : vector<1x128xf32> to vector<16x128xf32>
    %124 = arith.addf %122, %123 : vector<16x128xf32>
    %125 = arith.negf %124 : vector<16x128xf32>
    %126 = math.exp %125 : vector<16x128xf32>
    %cst_66 = arith.constant 1.000000e+00 : f32
    %127 = vector.broadcast %cst_66 : f32 to vector<16x128xf32>
    %128 = arith.addf %127, %126 : vector<16x128xf32>
    %129 = arith.divf %127, %128 : vector<16x128xf32>
    %130 = arith.truncf %75 : vector<16x128xf32> to vector<16x128xbf16>
    %cst_67 = arith.constant dense<0.000000e+00> : vector<16x128xf32>
    %131 = tpu.matmul %130, %107, %cst_67 {dimension_numbers = #tpu.dot_dimension_numbers<[1], [0], [0], [1], [0, 0, 1, 1], [], []>} : vector<16x128xbf16>, vector<128x128xbf16>, vector<16x128xf32> -> vector<16x128xf32>
    %132 = vector.broadcast %108 : vector<1x128xf32> to vector<16x128xf32>
    %133 = arith.addf %131, %132 : vector<16x128xf32>
    %134 = arith.negf %133 : vector<16x128xf32>
    %135 = math.exp %134 : vector<16x128xf32>
    %cst_68 = arith.constant 1.000000e+00 : f32
    %136 = vector.broadcast %cst_68 : f32 to vector<16x128xf32>
    %137 = arith.addf %136, %135 : vector<16x128xf32>
    %138 = arith.divf %136, %137 : vector<16x128xf32>
    %139 = arith.truncf %138 : vector<16x128xf32> to vector<16x128xbf16>
    %cst_69 = arith.constant dense<0.000000e+00> : vector<16x128xf32>
    %140 = tpu.matmul %139, %110, %cst_69 {dimension_numbers = #tpu.dot_dimension_numbers<[1], [0], [0], [1], [0, 0, 1, 1], [], []>} : vector<16x128xbf16>, vector<128x128xbf16>, vector<16x128xf32> -> vector<16x128xf32>
    %141 = vector.broadcast %111 : vector<1x128xf32> to vector<16x128xf32>
    %142 = arith.addf %140, %141 : vector<16x128xf32>
    %143 = arith.negf %142 : vector<16x128xf32>
    %144 = math.exp %143 : vector<16x128xf32>
    %cst_70 = arith.constant 1.000000e+00 : f32
    %145 = vector.broadcast %cst_70 : f32 to vector<16x128xf32>
    %146 = arith.addf %145, %144 : vector<16x128xf32>
    %147 = arith.divf %145, %146 : vector<16x128xf32>
    %c0_71 = arith.constant 0 : index
    %c0_72 = arith.constant 0 : index
    %148 = vector.load %arg25[%c0_71, %c0_72] : memref<32x128xf32, #tpu.memory_space<vmem>>, vector<16x128xf32>
    tpu.vector_store %arg25[%c0_71, %c0_72], %129 {strides = array<i32>} : memref<32x128xf32, #tpu.memory_space<vmem>>, vector<16x128xf32>,
    %c16_73 = arith.constant 16 : index
    %c0_74 = arith.constant 0 : index
    %149 = vector.load %arg25[%c16_73, %c0_74] : memref<32x128xf32, #tpu.memory_space<vmem>>, vector<16x128xf32>
    tpu.vector_store %arg25[%c16_73, %c0_74], %147 {strides = array<i32>} : memref<32x128xf32, #tpu.memory_space<vmem>>, vector<16x128xf32>,
    %150 = vector.extract_strided_slice %147 {offsets = [0, 0], sizes = [16, 1], strides = [1, 1]} : vector<16x128xf32> to vector<16x1xf32>
    %cst_75 = arith.constant 1.000000e+00 : f32
    %151 = vector.broadcast %cst_75 : f32 to vector<16x1xf32>
    %152 = arith.subf %151, %150 : vector<16x1xf32>
    %153 = math.log %152 : vector<16x1xf32>
    %cst_76 = arith.constant -1.000000e+02 : f32
    %154 = vector.broadcast %cst_76 : f32 to vector<16x1xf32>
    %155 = arith.maximumf %153, %154 : vector<16x1xf32>
    %cst_77 = arith.constant 0.000000e+00 : f32
    %156 = vector.broadcast %cst_77 : f32 to vector<16x1xf32>
    %157 = arith.subf %156, %155 : vector<16x1xf32>
    %c0_78 = arith.constant 0 : index
    %c0_79 = arith.constant 0 : index
    %158 = vector.load %arg5[%c0_78, %c0_79] : memref<16x1xf32, #tpu.memory_space<vmem>>, vector<16x1xf32>
    %159 = arith.mulf %157, %158 : vector<16x1xf32>
    %cst_80 = arith.constant dense<0.000000e+00> : vector<1xf32>
    %160 = vector.multi_reduction <add>, %159, %cst_80 [0] : vector<16x1xf32> to vector<1xf32>
    %161 = vector.shape_cast %160 : vector<1xf32> to vector<1x1xf32>
    %162 = vector.broadcast %5 : f32 to vector<1x1xf32>
    %163 = arith.mulf %161, %162 : vector<1x1xf32>
    %c0_81 = arith.constant 0 : index
    %c0_82 = arith.constant 0 : index
    %164 = vector.load %arg27[%c0_81, %c0_82] : memref<1x1xf32, #tpu.memory_space<vmem>>, vector<1x1xf32>
    tpu.vector_store %arg27[%c0_81, %c0_82], %163 {strides = array<i32>} : memref<1x1xf32, #tpu.memory_space<vmem>>, vector<1x1xf32>,
    %165 = arith.subf %6, %105 : vector<16x128xf32>
    %166 = arith.mulf %165, %165 : vector<16x128xf32>
    %cst_83 = arith.constant dense<0.000000e+00> : vector<16xf32>
    %167 = vector.multi_reduction <add>, %166, %cst_83 [1] : vector<16x128xf32> to vector<16xf32>
    %168 = vector.shape_cast %167 : vector<16xf32> to vector<16x1xf32>
    %169 = math.sqrt %168 : vector<16x1xf32>
    %c0_84 = arith.constant 0 : index
    %c0_85 = arith.constant 0 : index
    %170 = vector.load %arg4[%c0_84, %c0_85] : memref<16x1xf32, #tpu.memory_space<vmem>>, vector<16x1xf32>
    %171 = arith.mulf %169, %170 : vector<16x1xf32>
    %cst_86 = arith.constant dense<0.000000e+00> : vector<1xf32>
    %172 = vector.multi_reduction <add>, %171, %cst_86 [0] : vector<16x1xf32> to vector<1xf32>
    %173 = vector.shape_cast %172 : vector<1xf32> to vector<1x1xf32>
    %174 = vector.broadcast %4 : f32 to vector<1x1xf32>
    %175 = arith.mulf %173, %174 : vector<1x1xf32>
    %c0_87 = arith.constant 0 : index
    %c0_88 = arith.constant 0 : index
    %176 = vector.load %arg26[%c0_87, %c0_88] : memref<1x1xf32, #tpu.memory_space<vmem>>, vector<1x1xf32>
    tpu.vector_store %arg26[%c0_87, %c0_88], %175 {strides = array<i32>} : memref<1x1xf32, #tpu.memory_space<vmem>>, vector<1x1xf32>,
    return
  }
  func.func @transform_0(%arg0: i32) -> (i32, i32) {
    %c0_i32 = arith.constant 0 : i32
    %c0_i32_0 = arith.constant 0 : i32
    %c0_i32_1 = arith.constant 0 : i32
    return %c0_i32, %c0_i32_0 : i32, i32
  }
  func.func @transform_1(%arg0: i32) -> (i32, i32) {
    %c0_i32 = arith.constant 0 : i32
    %c0_i32_0 = arith.constant 0 : i32
    %c0_i32_1 = arith.constant 0 : i32
    return %c0_i32, %c0_i32_0 : i32, i32
  }
  func.func @transform_2(%arg0: i32) -> (i32, i32) {
    %c0_i32 = arith.constant 0 : i32
    %c0_i32_0 = arith.constant 0 : i32
    %c0_i32_1 = arith.constant 0 : i32
    return %c0_i32, %c0_i32_0 : i32, i32
  }
  func.func @transform_3(%arg0: i32) -> (i32, i32) {
    %c0_i32 = arith.constant 0 : i32
    %c0_i32_0 = arith.constant 0 : i32
    %c0_i32_1 = arith.constant 0 : i32
    return %c0_i32, %c0_i32_0 : i32, i32
  }
  func.func @transform_4(%arg0: i32) -> (i32, i32) {
    %c0_i32 = arith.constant 0 : i32
    %c0_i32_0 = arith.constant 0 : i32
    %c0_i32_1 = arith.constant 0 : i32
    return %c0_i32, %c0_i32_0 : i32, i32
  }
  func.func @transform_5(%arg0: i32) -> (i32, i32) {
    %c0_i32 = arith.constant 0 : i32
    %c0_i32_0 = arith.constant 0 : i32
    %c0_i32_1 = arith.constant 0 : i32
    return %c0_i32, %c0_i32_0 : i32, i32
  }
  func.func @transform_6(%arg0: i32) -> (i32, i32) {
    %c0_i32 = arith.constant 0 : i32
    %c0_i32_0 = arith.constant 0 : i32
    %c0_i32_1 = arith.constant 0 : i32
    return %c0_i32, %c0_i32_0 : i32, i32
  }
  func.func @transform_7(%arg0: i32) -> (i32, i32) {
    %c0_i32 = arith.constant 0 : i32
    %c0_i32_0 = arith.constant 0 : i32
    %c0_i32_1 = arith.constant 0 : i32
    return %c0_i32, %c0_i32_0 : i32, i32
  }
  func.func @transform_8(%arg0: i32) -> (i32, i32) {
    %c0_i32 = arith.constant 0 : i32
    %c0_i32_0 = arith.constant 0 : i32
    %c0_i32_1 = arith.constant 0 : i32
    return %c0_i32, %c0_i32_0 : i32, i32
  }
  func.func @transform_9(%arg0: i32) -> (i32, i32) {
    %c0_i32 = arith.constant 0 : i32
    %c0_i32_0 = arith.constant 0 : i32
    %c0_i32_1 = arith.constant 0 : i32
    return %c0_i32, %c0_i32_0 : i32, i32
  }
  func.func @transform_10(%arg0: i32) -> (i32, i32) {
    %c0_i32 = arith.constant 0 : i32
    %c0_i32_0 = arith.constant 0 : i32
    %c0_i32_1 = arith.constant 0 : i32
    return %c0_i32, %c0_i32_0 : i32, i32
  }
  func.func @transform_11(%arg0: i32) -> (i32, i32) {
    %c0_i32 = arith.constant 0 : i32
    %c0_i32_0 = arith.constant 0 : i32
    %c0_i32_1 = arith.constant 0 : i32
    return %c0_i32, %c0_i32_0 : i32, i32
  }
  func.func @transform_12(%arg0: i32) -> (i32, i32) {
    %c0_i32 = arith.constant 0 : i32
    %c0_i32_0 = arith.constant 0 : i32
    %c0_i32_1 = arith.constant 0 : i32
    return %c0_i32, %c0_i32_0 : i32, i32
  }
  func.func @transform_13(%arg0: i32) -> (i32, i32) {
    %c0_i32 = arith.constant 0 : i32
    %c0_i32_0 = arith.constant 0 : i32
    %c0_i32_1 = arith.constant 0 : i32
    return %c0_i32, %c0_i32_0 : i32, i32
  }
  func.func @transform_14(%arg0: i32) -> (i32, i32) {
    %c0_i32 = arith.constant 0 : i32
    %c0_i32_0 = arith.constant 0 : i32
    %c0_i32_1 = arith.constant 0 : i32
    return %c0_i32, %c0_i32_0 : i32, i32
  }
  func.func @transform_15(%arg0: i32) -> (i32, i32) {
    %c0_i32 = arith.constant 0 : i32
    %c0_i32_0 = arith.constant 0 : i32
    %c0_i32_1 = arith.constant 0 : i32
    return %c0_i32, %c0_i32_0 : i32, i32
  }
  func.func @transform_16(%arg0: i32) -> (i32, i32) {
    %c0_i32 = arith.constant 0 : i32
    %c0_i32_0 = arith.constant 0 : i32
    %c0_i32_1 = arith.constant 0 : i32
    return %c0_i32, %c0_i32_0 : i32, i32
  }
  func.func @transform_17(%arg0: i32) -> (i32, i32) {
    %c0_i32 = arith.constant 0 : i32
    %c0_i32_0 = arith.constant 0 : i32
    %c0_i32_1 = arith.constant 0 : i32
    return %c0_i32, %c0_i32_0 : i32, i32
  }
  func.func @transform_18(%arg0: i32) -> (i32, i32) {
    %c0_i32 = arith.constant 0 : i32
    %c0_i32_0 = arith.constant 0 : i32
    %c0_i32_1 = arith.constant 0 : i32
    return %c0_i32, %c0_i32_0 : i32, i32
  }
  func.func @transform_19(%arg0: i32) -> (i32, i32) {
    %c0_i32 = arith.constant 0 : i32
    %c0_i32_0 = arith.constant 0 : i32
    %c0_i32_1 = arith.constant 0 : i32
    return %c0_i32, %c0_i32_0 : i32, i32
  }
  func.func @transform_20(%arg0: i32) -> (i32, i32) {
    %c0_i32 = arith.constant 0 : i32
    %c0_i32_0 = arith.constant 0 : i32
    %c0_i32_1 = arith.constant 0 : i32
    return %c0_i32, %c0_i32_0 : i32, i32
  }
  func.func @transform_21(%arg0: i32) -> i32 {
    %c0_i32 = arith.constant 0 : i32
    %c0_i32_0 = arith.constant 0 : i32
    return %c0_i32 : i32
  }
  func.func @transform_22(%arg0: i32) -> i32 {
    %c0_i32 = arith.constant 0 : i32
    %c0_i32_0 = arith.constant 0 : i32
    return %c0_i32 : i32
  }
  func.func @transform_23(%arg0: i32) -> (i32, i32) {
    %c0_i32 = arith.constant 0 : i32
    %c0_i32_0 = arith.constant 0 : i32
    %c0_i32_1 = arith.constant 0 : i32
    return %c0_i32, %c0_i32_0 : i32, i32
  }
  func.func @transform_24(%arg0: i32) -> (i32, i32) {
    %c0_i32 = arith.constant 0 : i32
    %c0_i32_0 = arith.constant 0 : i32
    %c0_i32_1 = arith.constant 0 : i32
    return %c0_i32, %c0_i32_0 : i32, i32
  }
  func.func @transform_25(%arg0: i32) -> (i32, i32) {
    %c0_i32 = arith.constant 0 : i32
    %c0_i32_0 = arith.constant 0 : i32
    %c0_i32_1 = arith.constant 0 : i32
    return %c0_i32, %c0_i32_0 : i32, i32
  }
  func.func @transform_26(%arg0: i32) -> (i32, i32) {
    %c0_i32 = arith.constant 0 : i32
    %c0_i32_0 = arith.constant 0 : i32
    %c0_i32_1 = arith.constant 0 : i32
    return %c0_i32, %c0_i32_0 : i32, i32
  }
}

</mosaic_0001>

<llo_original>
// kernel: model_forward.1
$region0: #{model_forward.1}
  #allocation0 [shape = 'u32[]', space=smem, size = 0x4, offset = 0x4, fixed_abs, tag = 'smem constant byte address 0x4 - core index']
  #allocation1 [shape = 'u32[72,128]{1,0:T(1,128)}', space=vmem, size = 0x9000, scoped, tag = 'internal scratch']
  %s0 = inlined_call_operand.vmem [shape: f32[16,128], index: 0, kind: input, shape index: {}]
  %s1 = inlined_call_operand.vmem [shape: f32[16,128], index: 1, kind: input, shape index: {}]
  %s2 = inlined_call_operand.vmem [shape: f32[16,16], index: 2, kind: input, shape index: {}]
  %s3 = inlined_call_operand.vmem [shape: f32[16,1], index: 3, kind: input, shape index: {}]
  %s4 = inlined_call_operand.vmem [shape: f32[16,1], index: 4, kind: input, shape index: {}]
  %s5 = inlined_call_operand.hbm [shape: f32[128,128], index: 5, kind: input, shape index: {}]
  %s6 = inlined_call_operand.vmem [shape: f32[1,128], index: 6, kind: input, shape index: {}]
  %s7 = inlined_call_operand.hbm [shape: f32[128,128], index: 7, kind: input, shape index: {}]
  %s8 = inlined_call_operand.vmem [shape: f32[1,128], index: 8, kind: input, shape index: {}]
  %s9 = inlined_call_operand.hbm [shape: f32[128,128], index: 9, kind: input, shape index: {}]
  %s10 = inlined_call_operand.vmem [shape: f32[1,128], index: 10, kind: input, shape index: {}]
  %s11 = inlined_call_operand.hbm [shape: f32[128,128], index: 11, kind: input, shape index: {}]
  %s12 = inlined_call_operand.vmem [shape: f32[1,128], index: 12, kind: input, shape index: {}]
  %s13 = inlined_call_operand.hbm [shape: f32[128,128], index: 13, kind: input, shape index: {}]
  %s14 = inlined_call_operand.vmem [shape: f32[1,128], index: 14, kind: input, shape index: {}]
  %s15 = inlined_call_operand.hbm [shape: f32[128,128], index: 15, kind: input, shape index: {}]
  %s16 = inlined_call_operand.vmem [shape: f32[1,128], index: 16, kind: input, shape index: {}]
  %s17 = inlined_call_operand.hbm [shape: f32[128,128], index: 17, kind: input, shape index: {}]
  %s18 = inlined_call_operand.vmem [shape: f32[1,128], index: 18, kind: input, shape index: {}]
  %s19 = inlined_call_operand.hbm [shape: f32[128,128], index: 19, kind: input, shape index: {}]
  %s20 = inlined_call_operand.vmem [shape: f32[1,128], index: 20, kind: input, shape index: {}]
  %s21 = inlined_call_operand.vmem [shape: f32[4], index: 21, kind: input, shape index: {}]
  %s22 = inlined_call_operand.vmem [shape: f32[2], index: 22, kind: input, shape index: {}]
  %s23 = inlined_call_operand.hbm [shape: f32[32,128], index: 23, kind: output, shape index: {0}]
  %s24 = inlined_call_operand.vmem [shape: f32[32,128], index: 24, kind: output, shape index: {1}]
  %s25 = inlined_call_operand.hbm [shape: f32[1,1], index: 25, kind: output, shape index: {2}]
  %s26 = inlined_call_operand.hbm [shape: f32[1,1], index: 26, kind: output, shape index: {3}]
  %27 = xla_tuple %s23, %s24, %s25, %s26
  %s28 = sld [smem:[#allocation0]]
  $region166: #{model_forward.1} parent=0
    _
  %s30 = ssub.s32 1, %s28
  %s31 = scalar_select 0, %s30, %s28
  $region1: #{model_forward.1} parent=0
    #allocation2 [shape = 'u8[65536]{0}', space=vmem, size = 0x10000, scoped, tag = 'input window, operand 5, single buffered']
    #allocation3 [shape = 's32[1]{0}', space=sflag, size = 0x4, scoped, tag = 'scoped memory for model_forward.1']
    #allocation4 [shape = 's32[1]{0}', space=sflag, size = 0x4, scoped, tag = 'scoped memory for model_forward.1']
    #allocation5 [shape = 's32[1]{0}', space=sflag, size = 0x4, scoped, tag = 'scoped memory for model_forward.1']
    #allocation6 [shape = 'u8[65536]{0}', space=vmem, size = 0x10000, scoped, tag = 'input window, operand 7, single buffered']
    #allocation7 [shape = 's32[1]{0}', space=sflag, size = 0x4, scoped, tag = 'scoped memory for model_forward.1']
    #allocation8 [shape = 'u8[65536]{0}', space=vmem, size = 0x10000, scoped, tag = 'input window, operand 9, single buffered']
    #allocation9 [shape = 'u8[65536]{0}', space=vmem, size = 0x10000, scoped, tag = 'input window, operand 11, single buffered']
    #allocation10 [shape = 's32[1]{0}', space=sflag, size = 0x4, scoped, tag = 'scoped memory for model_forward.1']
    #allocation11 [shape = 'u8[65536]{0}', space=vmem, size = 0x10000, scoped, tag = 'input window, operand 13, single buffered']
    #allocation12 [shape = 'u8[65536]{0}', space=vmem, size = 0x10000, scoped, tag = 'input window, operand 15, single buffered']
    #allocation13 [shape = 's32[1]{0}', space=sflag, size = 0x4, scoped, tag = 'scoped memory for model_forward.1']
    #allocation14 [shape = 'u8[65536]{0}', space=vmem, size = 0x10000, scoped, tag = 'input window, operand 17, single buffered']
    #allocation15 [shape = 'u8[65536]{0}', space=vmem, size = 0x10000, scoped, tag = 'input window, operand 19, single buffered']
    #allocation16 [shape = 's32[1]{0}', space=sflag, size = 0x4, scoped, tag = 'scoped memory for model_forward.1']
    #allocation17 [shape = 'u8[512]{0}', space=smem, size = 0x200, scoped, tag = 'input window, operand 21, single buffered']
    #allocation18 [shape = 'u8[512]{0}', space=smem, size = 0x200, scoped, tag = 'input window, operand 22, single buffered']
    #allocation19 [shape = 's32[1]{0}', space=sflag, size = 0x4, scoped, tag = 'scoped memory for model_forward.1']
    #allocation20 [shape = 'u8[16384]{0}', space=vmem, size = 0x4000, scoped, tag = 'output window, operand 0, single buffered']
    #allocation21 [shape = 'u8[512]{0}', space=vmem, size = 0x400, scoped, tag = 'output window, operand 2, single buffered']
    #allocation22 [shape = 's32[1]{0}', space=sflag, size = 0x4, scoped, tag = 'scoped memory for model_forward.1']
    #allocation23 [shape = 'u8[512]{0}', space=vmem, size = 0x400, scoped, tag = 'output window, operand 3, single buffered']
    %32 = vsyncpa [#allocation3], 0
    %33 = vsyncpa [#allocation7], 0
    %34 = vsyncpa [#allocation10], 0
    %35 = vsyncpa [#allocation13], 0
    %36 = vsyncpa [#allocation16], 0
    %37 = vsyncpa [#allocation5], 0
    %38 = vsyncpa [#allocation19], 0
    %39 = vsyncpa [#allocation4], 0
    %40 = vsyncpa [#allocation22], 0
    // Predicated region
    $region2: #{model_forward.1} parent=1 // pred_check
      _
    $region3: #{model_forward.1} parent=1 // pred_check_branch
      %42 = sbr.rel (0) target = $region5
    $region4: #{model_forward.1} parent=1 // pred_region
      _
    $region5: #{model_forward.1} parent=1 // pred_fallthru
      _
    // Predicated region
    $region6: #{model_forward.1} parent=1 // pred_check
      _
    $region7: #{model_forward.1} parent=1 // pred_check_branch
      %44 = sbr.rel (0) target = $region9
    $region8: #{model_forward.1} parent=1 // pred_region
      _
    $region9: #{model_forward.1} parent=1 // pred_fallthru
      _
    // Predicated region
    $region10: #{model_forward.1} parent=1 // pred_check
      _
    $region11: #{model_forward.1} parent=1 // pred_check_branch
      %46 = sbr.rel (0) target = $region13
    $region12: #{model_forward.1} parent=1 // pred_region
      _
    $region13: #{model_forward.1} parent=1 // pred_fallthru
      _
    // Predicated region
    $region14: #{model_forward.1} parent=1 // pred_check
      _
    $region15: #{model_forward.1} parent=1 // pred_check_branch
      %48 = sbr.rel (0) target = $region17
    $region16: #{model_forward.1} parent=1 // pred_region
      _
    $region17: #{model_forward.1} parent=1 // pred_fallthru
      _
    // Predicated region
    $region18: #{model_forward.1} parent=1 // pred_check
      _
    $region19: #{model_forward.1} parent=1 // pred_check_branch
      %50 = sbr.rel (0) target = $region21
    $region20: #{model_forward.1} parent=1 // pred_region
      _
    $region21: #{model_forward.1} parent=1 // pred_fallthru
      _
    // Predicated region
    $region22: #{model_forward.1} parent=1 // pred_check
      _
    $region23: #{model_forward.1} parent=1 // pred_check_branch
      %52 = sbr.rel (0) target = $region25
    $region24: #{model_forward.1} parent=1 // pred_region
      %54 = vsyncadd [#allocation3], 0
      %s55 = sshll.u32 %s5, 4
      %s56 = int_to_ptr.hbm [resolvable:$true] %s55
      %s57 = sshll.u32 [#allocation2], 4
      %s58 = int_to_ptr.vmem [resolvable:$true] %s57
      %63 = dma.hbm_to_vmem [thread:$0]  %s56, 2048, %s58, [#allocation3], 128, 128, 8
    $region25: #{model_forward.1} parent=1 // pred_fallthru
      _
    // Predicated region
    $region26: #{model_forward.1} parent=1 // pred_check
      _
    $region27: #{model_forward.1} parent=1 // pred_check_branch
      %65 = sbr.rel (0) target = $region29
    $region28: #{model_forward.1} parent=1 // pred_region
      _
    $region29: #{model_forward.1} parent=1 // pred_fallthru
      _
    // Predicated region
    $region30: #{model_forward.1} parent=1 // pred_check
      _
    $region31: #{model_forward.1} parent=1 // pred_check_branch
      %67 = sbr.rel (0) target = $region33
    $region32: #{model_forward.1} parent=1 // pred_region
      %69 = vsyncadd [#allocation7], 0
      %s70 = sshll.u32 %s7, 4
      %s71 = int_to_ptr.hbm [resolvable:$true] %s70
      %s72 = sshll.u32 [#allocation6], 4
      %s73 = int_to_ptr.vmem [resolvable:$true] %s72
      %78 = dma.hbm_to_vmem [thread:$0]  %s71, 2048, %s73, [#allocation7], 128, 128, 8
    $region33: #{model_forward.1} parent=1 // pred_fallthru
      _
    // Predicated region
    $region34: #{model_forward.1} parent=1 // pred_check
      _
    $region35: #{model_forward.1} parent=1 // pred_check_branch
      %80 = sbr.rel (0) target = $region37
    $region36: #{model_forward.1} parent=1 // pred_region
      _
    $region37: #{model_forward.1} parent=1 // pred_fallthru
      _
    // Predicated region
    $region38: #{model_forward.1} parent=1 // pred_check
      _
    $region39: #{model_forward.1} parent=1 // pred_check_branch
      %82 = sbr.rel (0) target = $region41
    $region40: #{model_forward.1} parent=1 // pred_region
      %84 = vsyncadd [#allocation7], 0
      %s85 = sshll.u32 %s9, 4
      %s86 = int_to_ptr.hbm [resolvable:$true] %s85
      %s87 = sshll.u32 [#allocation8], 4
      %s88 = int_to_ptr.vmem [resolvable:$true] %s87
      %93 = dma.hbm_to_vmem [thread:$0]  %s86, 2048, %s88, [#allocation7], 128, 128, 8
    $region41: #{model_forward.1} parent=1 // pred_fallthru
      _
    // Predicated region
    $region42: #{model_forward.1} parent=1 // pred_check
      _
    $region43: #{model_forward.1} parent=1 // pred_check_branch
      %95 = sbr.rel (0) target = $region45
    $region44: #{model_forward.1} parent=1 // pred_region
      _
    $region45: #{model_forward.1} parent=1 // pred_fallthru
      _
    // Predicated region
    $region46: #{model_forward.1} parent=1 // pred_check
      _
    $region47: #{model_forward.1} parent=1 // pred_check_branch
      %97 = sbr.rel (0) target = $region49
    $region48: #{model_forward.1} parent=1 // pred_region
      %99 = vsyncadd [#allocation10], 0
      %s100 = sshll.u32 %s11, 4
      %s101 = int_to_ptr.hbm [resolvable:$true] %s100
      %s102 = sshll.u32 [#allocation9], 4
      %s103 = int_to_ptr.vmem [resolvable:$true] %s102
      %108 = dma.hbm_to_vmem [thread:$0]  %s101, 2048, %s103, [#allocation10], 128, 128, 8
    $region49: #{model_forward.1} parent=1 // pred_fallthru
      _
    // Predicated region
    $region50: #{model_forward.1} parent=1 // pred_check
      _
    $region51: #{model_forward.1} parent=1 // pred_check_branch
      %110 = sbr.rel (0) target = $region53
    $region52: #{model_forward.1} parent=1 // pred_region
      _
    $region53: #{model_forward.1} parent=1 // pred_fallthru
      _
    // Predicated region
    $region54: #{model_forward.1} parent=1 // pred_check
      _
    $region55: #{model_forward.1} parent=1 // pred_check_branch
      %112 = sbr.rel (0) target = $region57
    $region56: #{model_forward.1} parent=1 // pred_region
      %114 = vsyncadd [#allocation10], 0
      %s115 = sshll.u32 %s13, 4
      %s116 = int_to_ptr.hbm [resolvable:$true] %s115
      %s117 = sshll.u32 [#allocation11], 4
      %s118 = int_to_ptr.vmem [resolvable:$true] %s117
      %123 = dma.hbm_to_vmem [thread:$0]  %s116, 2048, %s118, [#allocation10], 128, 128, 8
    $region57: #{model_forward.1} parent=1 // pred_fallthru
      _
    // Predicated region
    $region58: #{model_forward.1} parent=1 // pred_check
      _
    $region59: #{model_forward.1} parent=1 // pred_check_branch
      %125 = sbr.rel (0) target = $region61
    $region60: #{model_forward.1} parent=1 // pred_region
      _
    $region61: #{model_forward.1} parent=1 // pred_fallthru
      _
    // Predicated region
    $region62: #{model_forward.1} parent=1 // pred_check
      _
    $region63: #{model_forward.1} parent=1 // pred_check_branch
      %127 = sbr.rel (0) target = $region65
    $region64: #{model_forward.1} parent=1 // pred_region
      %129 = vsyncadd [#allocation13], 0
      %s130 = sshll.u32 %s15, 4
      %s131 = int_to_ptr.hbm [resolvable:$true] %s130
      %s132 = sshll.u32 [#allocation12], 4
      %s133 = int_to_ptr.vmem [resolvable:$true] %s132
      %138 = dma.hbm_to_vmem [thread:$0]  %s131, 2048, %s133, [#allocation13], 128, 128, 8
    $region65: #{model_forward.1} parent=1 // pred_fallthru
      _
    // Predicated region
    $region66: #{model_forward.1} parent=1 // pred_check
      _
    $region67: #{model_forward.1} parent=1 // pred_check_branch
      %140 = sbr.rel (0) target = $region69
    $region68: #{model_forward.1} parent=1 // pred_region
      _
    $region69: #{model_forward.1} parent=1 // pred_fallthru
      _
    // Predicated region
    $region70: #{model_forward.1} parent=1 // pred_check
      _
    $region71: #{model_forward.1} parent=1 // pred_check_branch
      %142 = sbr.rel (0) target = $region73
    $region72: #{model_forward.1} parent=1 // pred_region
      %144 = vsyncadd [#allocation13], 0
      %s145 = sshll.u32 %s17, 4
      %s146 = int_to_ptr.hbm [resolvable:$true] %s145
      %s147 = sshll.u32 [#allocation14], 4
      %s148 = int_to_ptr.vmem [resolvable:$true] %s147
      %153 = dma.hbm_to_vmem [thread:$0]  %s146, 2048, %s148, [#allocation13], 128, 128, 8
    $region73: #{model_forward.1} parent=1 // pred_fallthru
      _
    // Predicated region
    $region74: #{model_forward.1} parent=1 // pred_check
      _
    $region75: #{model_forward.1} parent=1 // pred_check_branch
      %155 = sbr.rel (0) target = $region77
    $region76: #{model_forward.1} parent=1 // pred_region
      _
    $region77: #{model_forward.1} parent=1 // pred_fallthru
      _
    // Predicated region
    $region78: #{model_forward.1} parent=1 // pred_check
      _
    $region79: #{model_forward.1} parent=1 // pred_check_branch
      %157 = sbr.rel (0) target = $region81
    $region80: #{model_forward.1} parent=1 // pred_region
      %159 = vsyncadd [#allocation16], 0
      %s160 = sshll.u32 %s19, 4
      %s161 = int_to_ptr.hbm [resolvable:$true] %s160
      %s162 = sshll.u32 [#allocation15], 4
      %s163 = int_to_ptr.vmem [resolvable:$true] %s162
      %168 = dma.hbm_to_vmem [thread:$0]  %s161, 2048, %s163, [#allocation16], 128, 128, 8
    $region81: #{model_forward.1} parent=1 // pred_fallthru
      _
    // Predicated region
    $region82: #{model_forward.1} parent=1 // pred_check
      _
    $region83: #{model_forward.1} parent=1 // pred_check_branch
      %170 = sbr.rel (0) target = $region85
    $region84: #{model_forward.1} parent=1 // pred_region
      _
    $region85: #{model_forward.1} parent=1 // pred_fallthru
      _
    // Predicated region
    $region86: #{model_forward.1} parent=1 // pred_check
      _
    $region87: #{model_forward.1} parent=1 // pred_check_branch
      %172 = sbr.rel (0) target = $region89
    $region88: #{model_forward.1} parent=1 // pred_region
      %174 = vsyncadd [#allocation5], 0
      %s176 = sshll.u32 %s21, 4
      %s177 = int_to_ptr.vmem [resolvable:$true] %s176
      %179 = dma.vmem_to_smem %s177, 16, [#allocation17], [#allocation5]
    $region89: #{model_forward.1} parent=1 // pred_fallthru
      _
    // Predicated region
    $region90: #{model_forward.1} parent=1 // pred_check
      _
    $region91: #{model_forward.1} parent=1 // pred_check_branch
      %181 = sbr.rel (0) target = $region93
    $region92: #{model_forward.1} parent=1 // pred_region
      %183 = vsyncadd [#allocation19], 0
      %s185 = sshll.u32 %s22, 4
      %s186 = int_to_ptr.vmem [resolvable:$true] %s185
      %188 = dma.vmem_to_smem %s186, 16, [#allocation18], [#allocation19]
    $region93: #{model_forward.1} parent=1 // pred_fallthru
      _
    // Predicated region
    $region94: #{model_forward.1} parent=1 // pred_check
      _
    $region95: #{model_forward.1} parent=1 // pred_check_branch
      %190 = sbr.rel (0) target = $region97
    $region96: #{model_forward.1} parent=1 // pred_region
      %192 = dma.done [#allocation3], 2048
    $region97: #{model_forward.1} parent=1 // pred_fallthru
      _
    // Predicated region
    $region98: #{model_forward.1} parent=1 // pred_check
      _
    $region99: #{model_forward.1} parent=1 // pred_check_branch
      %194 = sbr.rel (0) target = $region101
    $region100: #{model_forward.1} parent=1 // pred_region
      %196 = dma.done [#allocation7], 2048
    $region101: #{model_forward.1} parent=1 // pred_fallthru
      _
    // Predicated region
    $region102: #{model_forward.1} parent=1 // pred_check
      _
    $region103: #{model_forward.1} parent=1 // pred_check_branch
      %198 = sbr.rel (0) target = $region105
    $region104: #{model_forward.1} parent=1 // pred_region
      %200 = dma.done [#allocation7], 2048
    $region105: #{model_forward.1} parent=1 // pred_fallthru
      _
    // Predicated region
    $region106: #{model_forward.1} parent=1 // pred_check
      _
    $region107: #{model_forward.1} parent=1 // pred_check_branch
      %202 = sbr.rel (0) target = $region109
    $region108: #{model_forward.1} parent=1 // pred_region
      %204 = dma.done [#allocation10], 2048
    $region109: #{model_forward.1} parent=1 // pred_fallthru
      _
    // Predicated region
    $region110: #{model_forward.1} parent=1 // pred_check
      _
    $region111: #{model_forward.1} parent=1 // pred_check_branch
      %206 = sbr.rel (0) target = $region113
    $region112: #{model_forward.1} parent=1 // pred_region
      %208 = dma.done [#allocation10], 2048
    $region113: #{model_forward.1} parent=1 // pred_fallthru
      _
    // Predicated region
    $region114: #{model_forward.1} parent=1 // pred_check
      _
    $region115: #{model_forward.1} parent=1 // pred_check_branch
      %210 = sbr.rel (0) target = $region117
    $region116: #{model_forward.1} parent=1 // pred_region
      %212 = dma.done [#allocation13], 2048
    $region117: #{model_forward.1} parent=1 // pred_fallthru
      _
    // Predicated region
    $region118: #{model_forward.1} parent=1 // pred_check
      _
    $region119: #{model_forward.1} parent=1 // pred_check_branch
      %214 = sbr.rel (0) target = $region121
    $region120: #{model_forward.1} parent=1 // pred_region
      %216 = dma.done [#allocation13], 2048
    $region121: #{model_forward.1} parent=1 // pred_fallthru
      _
    // Predicated region
    $region122: #{model_forward.1} parent=1 // pred_check
      _
    $region123: #{model_forward.1} parent=1 // pred_check_branch
      %218 = sbr.rel (0) target = $region125
    $region124: #{model_forward.1} parent=1 // pred_region
      %220 = dma.done [#allocation16], 2048
    $region125: #{model_forward.1} parent=1 // pred_fallthru
      _
    // Predicated region
    $region126: #{model_forward.1} parent=1 // pred_check
      _
    $region127: #{model_forward.1} parent=1 // pred_check_branch
      %222 = sbr.rel (0) target = $region129
    $region128: #{model_forward.1} parent=1 // pred_region
      %224 = dma.done [#allocation5], 16
    $region129: #{model_forward.1} parent=1 // pred_fallthru
      _
    // Predicated region
    $region130: #{model_forward.1} parent=1 // pred_check
      _
    $region131: #{model_forward.1} parent=1 // pred_check_branch
      %226 = sbr.rel (0) target = $region133
    $region132: #{model_forward.1} parent=1 // pred_region
      %228 = dma.done [#allocation19], 16
    $region133: #{model_forward.1} parent=1 // pred_fallthru
      _
    %229 = sfence
    %s231 = sld [smem:[#allocation17]]
    %s232 = sld [smem:[#allocation17 + $0x1]]
    %s233 = sld [smem:[#allocation17 + $0x2]]
    %s234 = sld [smem:[#allocation17 + $0x3]]
    %s235 = sld [smem:[#allocation18]]
    %s236 = sld [smem:[#allocation18 + $0x1]]
    %v237 = vld [vmem:[%s0] sm:$0xff]
    %v238 = vld [vmem:[%s0 + $0x8] sm:$0xff]
    %v239 = vld [vmem:[%s2] sm:$0xff]
    %v240 = vld [vmem:[%s2 + $0x8] sm:$0xff]
    %v241 = vpack.c.bf16 %v240, %v239
    %v242 = vld [vmem:[%s1] sm:$0xff]
    %v243 = vld [vmem:[%s1 + $0x8] sm:$0xff]
    %v244 = vld [vmem:[#allocation2] sm:$0xff]
    %v245 = vld [vmem:[#allocation2 + $0x8] sm:$0xff]
    %v246 = vld [vmem:[#allocation2 + $0x10] sm:$0xff]
    %v247 = vld [vmem:[#allocation2 + $0x18] sm:$0xff]
    %v248 = vld [vmem:[#allocation2 + $0x20] sm:$0xff]
    %v249 = vld [vmem:[#allocation2 + $0x28] sm:$0xff]
    %v250 = vld [vmem:[#allocation2 + $0x30] sm:$0xff]
    %v251 = vld [vmem:[#allocation2 + $0x38] sm:$0xff]
    %v252 = vld [vmem:[#allocation2 + $0x40] sm:$0xff]
    %v253 = vld [vmem:[#allocation2 + $0x48] sm:$0xff]
    %v254 = vld [vmem:[#allocation2 + $0x50] sm:$0xff]
    %v255 = vld [vmem:[#allocation2 + $0x58] sm:$0xff]
    %v256 = vld [vmem:[#allocation2 + $0x60] sm:$0xff]
    %v257 = vld [vmem:[#allocation2 + $0x68] sm:$0xff]
    %v258 = vld [vmem:[#allocation2 + $0x70] sm:$0xff]
    %v259 = vld [vmem:[#allocation2 + $0x78] sm:$0xff]
    %v260 = vpack.c.bf16 %v243, %v242
    %v261 = vpack.c.bf16 %v245, %v244
    %v262 = vpack.c.bf16 %v247, %v246
    %v263 = vpack.c.bf16 %v249, %v248
    %v264 = vpack.c.bf16 %v251, %v250
    %v265 = vpack.c.bf16 %v253, %v252
    %v266 = vpack.c.bf16 %v255, %v254
    %v267 = vpack.c.bf16 %v257, %v256
    %v268 = vpack.c.bf16 %v259, %v258
    %v269 = vld [vmem:[%s6] sm:$0x1]
    %v271 = vperm.slane %v269, 0
    %273 = vmatpush.bf16.msra.mxu0 %v268
    %274 = vmatpush.bf16.msra.mxu0 %v267
    %275 = vmatpush.bf16.msra.mxu0 %v266
    %276 = vmatpush.bf16.msra.mxu0 %v265
    %277 = vmatpush.bf16.msra.mxu0 %v264
    %278 = vmatpush.bf16.msra.mxu0 %v263
    %279 = vmatpush.bf16.msra.mxu0 %v262
    %280 = vmatpush.bf16.msra.mxu0 %v261
    %281 = vmatmul.bf16.gmra.mxu0 %v260
    %v282 = vpop.f32.mrf.mxu0
    %v283 = vadd.f32 %v271, %v282
    %v284 = vpop.f32.mrf.mxu0
    %v285 = vadd.f32 %v271, %v284
    %286 = vdwg.mxu0
    %v287 = vmax.f32 %v283, 0.0
    %v288 = vmax.f32 %v285, 0.0
    %v289 = vld [vmem:[#allocation6] sm:$0xff]
    %v290 = vld [vmem:[#allocation6 + $0x8] sm:$0xff]
    %v291 = vld [vmem:[#allocation6 + $0x10] sm:$0xff]
    %v292 = vld [vmem:[#allocation6 + $0x18] sm:$0xff]
    %v293 = vld [vmem:[#allocation6 + $0x20] sm:$0xff]
    %v294 = vld [vmem:[#allocation6 + $0x28] sm:$0xff]
    %v295 = vld [vmem:[#allocation6 + $0x30] sm:$0xff]
    %v296 = vld [vmem:[#allocation6 + $0x38] sm:$0xff]
    %v297 = vld [vmem:[#allocation6 + $0x40] sm:$0xff]
    %v298 = vld [vmem:[#allocation6 + $0x48] sm:$0xff]
    %v299 = vld [vmem:[#allocation6 + $0x50] sm:$0xff]
    %v300 = vld [vmem:[#allocation6 + $0x58] sm:$0xff]
    %v301 = vld [vmem:[#allocation6 + $0x60] sm:$0xff]
    %v302 = vld [vmem:[#allocation6 + $0x68] sm:$0xff]
    %v303 = vld [vmem:[#allocation6 + $0x70] sm:$0xff]
    %v304 = vld [vmem:[#allocation6 + $0x78] sm:$0xff]
    %v305 = vpack.c.bf16 %v288, %v287
    %v306 = vpack.c.bf16 %v290, %v289
    %v307 = vpack.c.bf16 %v292, %v291
    %v308 = vpack.c.bf16 %v294, %v293
    %v309 = vpack.c.bf16 %v296, %v295
    %v310 = vpack.c.bf16 %v298, %v297
    %v311 = vpack.c.bf16 %v300, %v299
    %v312 = vpack.c.bf16 %v302, %v301
    %v313 = vpack.c.bf16 %v304, %v303
    %v314 = vld [vmem:[%s8] sm:$0x1]
    %v316 = vperm.slane %v314, 0
    %318 = vmatpush.bf16.msra.mxu0 %v313
    %319 = vmatpush.bf16.msra.mxu0 %v312
    %320 = vmatpush.bf16.msra.mxu0 %v311
    %321 = vmatpush.bf16.msra.mxu0 %v310
    %322 = vmatpush.bf16.msra.mxu0 %v309
    %323 = vmatpush.bf16.msra.mxu0 %v308
    %324 = vmatpush.bf16.msra.mxu0 %v307
    %325 = vmatpush.bf16.msra.mxu0 %v306
    %326 = vmatmul.bf16.gmra.mxu0 %v305
    %v327 = vpop.f32.mrf.mxu0
    %v328 = vadd.f32 %v316, %v327
    %v329 = vpop.f32.mrf.mxu0
    %v330 = vadd.f32 %v316, %v329
    %331 = vdwg.mxu0
    %v332 = vld [vmem:[#allocation8] sm:$0xff]
    %v333 = vld [vmem:[#allocation8 + $0x8] sm:$0xff]
    %v334 = vld [vmem:[#allocation8 + $0x10] sm:$0xff]
    %v335 = vld [vmem:[#allocation8 + $0x18] sm:$0xff]
    %v336 = vld [vmem:[#allocation8 + $0x20] sm:$0xff]
    %v337 = vld [vmem:[#allocation8 + $0x28] sm:$0xff]
    %v338 = vld [vmem:[#allocation8 + $0x30] sm:$0xff]
    %v339 = vld [vmem:[#allocation8 + $0x38] sm:$0xff]
    %v340 = vld [vmem:[#allocation8 + $0x40] sm:$0xff]
    %v341 = vld [vmem:[#allocation8 + $0x48] sm:$0xff]
    %v342 = vld [vmem:[#allocation8 + $0x50] sm:$0xff]
    %v343 = vld [vmem:[#allocation8 + $0x58] sm:$0xff]
    %v344 = vld [vmem:[#allocation8 + $0x60] sm:$0xff]
    %v345 = vld [vmem:[#allocation8 + $0x68] sm:$0xff]
    %v346 = vld [vmem:[#allocation8 + $0x70] sm:$0xff]
    %v347 = vld [vmem:[#allocation8 + $0x78] sm:$0xff]
    %v348 = vpack.c.bf16 %v333, %v332
    %v349 = vpack.c.bf16 %v335, %v334
    %v350 = vpack.c.bf16 %v337, %v336
    %v351 = vpack.c.bf16 %v339, %v338
    %v352 = vpack.c.bf16 %v341, %v340
    %v353 = vpack.c.bf16 %v343, %v342
    %v354 = vpack.c.bf16 %v345, %v344
    %v355 = vpack.c.bf16 %v347, %v346
    %v356 = vld [vmem:[%s10] sm:$0x1]
    %v357 = vld [vmem:[#allocation9] sm:$0xff]
    %v358 = vld [vmem:[#allocation9 + $0x8] sm:$0xff]
    %v359 = vld [vmem:[#allocation9 + $0x10] sm:$0xff]
    %v360 = vld [vmem:[#allocation9 + $0x18] sm:$0xff]
    %v361 = vld [vmem:[#allocation9 + $0x20] sm:$0xff]
    %v362 = vld [vmem:[#allocation9 + $0x28] sm:$0xff]
    %v363 = vld [vmem:[#allocation9 + $0x30] sm:$0xff]
    %v364 = vld [vmem:[#allocation9 + $0x38] sm:$0xff]
    %v365 = vld [vmem:[#allocation9 + $0x40] sm:$0xff]
    %v366 = vld [vmem:[#allocation9 + $0x48] sm:$0xff]
    %v367 = vld [vmem:[#allocation9 + $0x50] sm:$0xff]
    %v368 = vld [vmem:[#allocation9 + $0x58] sm:$0xff]
    %v369 = vld [vmem:[#allocation9 + $0x60] sm:$0xff]
    %v370 = vld [vmem:[#allocation9 + $0x68] sm:$0xff]
    %v371 = vld [vmem:[#allocation9 + $0x70] sm:$0xff]
    %v372 = vld [vmem:[#allocation9 + $0x78] sm:$0xff]
    %v373 = vpack.c.bf16 %v358, %v357
    %v374 = vpack.c.bf16 %v360, %v359
    %v375 = vpack.c.bf16 %v362, %v361
    %v376 = vpack.c.bf16 %v364, %v363
    %v377 = vpack.c.bf16 %v366, %v365
    %v378 = vpack.c.bf16 %v368, %v367
    %v379 = vpack.c.bf16 %v370, %v369
    %v380 = vpack.c.bf16 %v372, %v371
    %v381 = vld [vmem:[%s12] sm:$0x1]
    %v382 = vpack.c.bf16 %v238, %v237
    %383 = vmatpush.bf16.msra.mxu0 %v355
    %384 = vmatpush.bf16.msra.mxu0 %v354
    %385 = vmatpush.bf16.msra.mxu0 %v353
    %386 = vmatpush.bf16.msra.mxu0 %v352
    %387 = vmatpush.bf16.msra.mxu0 %v351
    %388 = vmatpush.bf16.msra.mxu0 %v350
    %389 = vmatpush.bf16.msra.mxu0 %v349
    %390 = vmatpush.bf16.msra.mxu0 %v348
    %391 = vmatmul.bf16.gmra.mxu0 %v382
    %v392 = vpop.f32.mrf.mxu0
    %v393 = vadd.f32 0.0, %v392
    %v394 = vpop.f32.mrf.mxu0
    %v395 = vadd.f32 0.0, %v394
    %396 = vdwg.mxu0
    %v397 = vpack.c.bf16 %v395, %v393
    %v399 = vperm.slane %v356, 0
    %vm401 = vcmask 130048
    %v403 = vsel %vm401, %v241, 0
    %405 = vmatpush.bf16.msra.mxu0 0
    %406 = vmatpush.bf16.msra.mxu0 0
    %407 = vmatpush.bf16.msra.mxu0 0
    %408 = vmatpush.bf16.msra.mxu0 0
    %409 = vmatpush.bf16.msra.mxu0 0
    %410 = vmatpush.bf16.msra.mxu0 0
    %411 = vmatpush.bf16.msra.mxu0 0
    %412 = vmatpush.bf16.msra.mxu0 %v397
    %413 = vmatmul.bf16.gmra.mxu0 %v403
    %v414 = vpop.f32.mrf.mxu0
    %v415 = vadd.f32 %v399, %v414
    %v416 = vpop.f32.mrf.mxu0
    %v417 = vadd.f32 %v399, %v416
    %418 = vdwg.mxu0
    %vm419 = vcmp.gt.f32.partialorder %v415, 0.0
    %vm420 = vcmp.gt.f32.partialorder %v417, 0.0
    %v421 = vstv %s231
    %v422 = vmul.f32 %v415, %v421
    %v423 = vmul.f32 %v417, %v421
    %v424 = vsel %vm419, %v415, %v422
    %v425 = vsel %vm420, %v417, %v423
    %v426 = vpack.c.bf16 %v330, %v328
    %427 = vmatpush.bf16.msra.mxu0 %v355
    %428 = vmatpush.bf16.msra.mxu0 %v354
    %429 = vmatpush.bf16.msra.mxu0 %v353
    %430 = vmatpush.bf16.msra.mxu0 %v352
    %431 = vmatpush.bf16.msra.mxu0 %v351
    %432 = vmatpush.bf16.msra.mxu0 %v350
    %433 = vmatpush.bf16.msra.mxu0 %v349
    %434 = vmatpush.bf16.msra.mxu0 %v348
    %435 = vmatmul.bf16.gmra.mxu0 %v426
    %v436 = vpop.f32.mrf.mxu0
    %v437 = vadd.f32 0.0, %v436
    %v438 = vpop.f32.mrf.mxu0
    %v439 = vadd.f32 0.0, %v438
    %440 = vdwg.mxu0
    %v441 = vpack.c.bf16 %v439, %v437
    %442 = vmatpush.bf16.msra.mxu0 0
    %443 = vmatpush.bf16.msra.mxu0 0
    %444 = vmatpush.bf16.msra.mxu0 0
    %445 = vmatpush.bf16.msra.mxu0 0
    %446 = vmatpush.bf16.msra.mxu0 0
    %447 = vmatpush.bf16.msra.mxu0 0
    %448 = vmatpush.bf16.msra.mxu0 0
    %449 = vmatpush.bf16.msra.mxu0 %v441
    %450 = vmatmul.bf16.gmra.mxu0 %v403
    %v451 = vpop.f32.mrf.mxu0
    %v452 = vadd.f32 %v399, %v451
    %v453 = vpop.f32.mrf.mxu0
    %v454 = vadd.f32 %v399, %v453
    %455 = vdwg.mxu0
    %vm456 = vcmp.gt.f32.partialorder %v452, 0.0
    %vm457 = vcmp.gt.f32.partialorder %v454, 0.0
    %v458 = vmul.f32 %v452, %v421
    %v459 = vmul.f32 %v454, %v421
    %v460 = vsel %vm456, %v452, %v458
    %v461 = vsel %vm457, %v454, %v459
    %v462 = vpack.c.bf16 %v425, %v424
    %463 = vmatpush.bf16.msra.mxu0 %v380
    %464 = vmatpush.bf16.msra.mxu0 %v379
    %465 = vmatpush.bf16.msra.mxu0 %v378
    %466 = vmatpush.bf16.msra.mxu0 %v377
    %467 = vmatpush.bf16.msra.mxu0 %v376
    %468 = vmatpush.bf16.msra.mxu0 %v375
    %469 = vmatpush.bf16.msra.mxu0 %v374
    %470 = vmatpush.bf16.msra.mxu0 %v373
    %471 = vmatmul.bf16.gmra.mxu0 %v462
    %v472 = vpop.f32.mrf.mxu0
    %v473 = vadd.f32 0.0, %v472
    %v474 = vpop.f32.mrf.mxu0
    %v475 = vadd.f32 0.0, %v474
    %476 = vdwg.mxu0
    %v477 = vpack.c.bf16 %v475, %v473
    %v479 = vperm.slane %v381, 0
    %481 = vmatpush.bf16.msra.mxu0 0
    %482 = vmatpush.bf16.msra.mxu0 0
    %483 = vmatpush.bf16.msra.mxu0 0
    %484 = vmatpush.bf16.msra.mxu0 0
    %485 = vmatpush.bf16.msra.mxu0 0
    %486 = vmatpush.bf16.msra.mxu0 0
    %487 = vmatpush.bf16.msra.mxu0 0
    %488 = vmatpush.bf16.msra.mxu0 %v477
    %489 = vmatmul.bf16.gmra.mxu0 %v403
    %v490 = vpop.f32.mrf.mxu0
    %v491 = vadd.f32 %v479, %v490
    %v492 = vpop.f32.mrf.mxu0
    %v493 = vadd.f32 %v479, %v492
    %494 = vdwg.mxu0
    %vm495 = vcmp.gt.f32.partialorder %v491, 0.0
    %vm496 = vcmp.gt.f32.partialorder %v493, 0.0
    %v497 = vstv %s232
    %v498 = vmul.f32 %v491, %v497
    %v499 = vmul.f32 %v493, %v497
    %v500 = vsel %vm495, %v491, %v498
    %v501 = vsel %vm496, %v493, %v499
    %v502 = vpack.c.bf16 %v461, %v460
    %503 = vmatpush.bf16.msra.mxu0 %v380
    %504 = vmatpush.bf16.msra.mxu0 %v379
    %505 = vmatpush.bf16.msra.mxu0 %v378
    %506 = vmatpush.bf16.msra.mxu0 %v377
    %507 = vmatpush.bf16.msra.mxu0 %v376
    %508 = vmatpush.bf16.msra.mxu0 %v375
    %509 = vmatpush.bf16.msra.mxu0 %v374
    %510 = vmatpush.bf16.msra.mxu0 %v373
    %511 = vmatmul.bf16.gmra.mxu0 %v502
    %v512 = vpop.f32.mrf.mxu0
    %v513 = vadd.f32 0.0, %v512
    %v514 = vpop.f32.mrf.mxu0
    %v515 = vadd.f32 0.0, %v514
    %516 = vdwg.mxu0
    %v517 = vpack.c.bf16 %v515, %v513
    %518 = vmatpush.bf16.msra.mxu0 0
    %519 = vmatpush.bf16.msra.mxu0 0
    %520 = vmatpush.bf16.msra.mxu0 0
    %521 = vmatpush.bf16.msra.mxu0 0
    %522 = vmatpush.bf16.msra.mxu0 0
    %523 = vmatpush.bf16.msra.mxu0 0
    %524 = vmatpush.bf16.msra.mxu0 0
    %525 = vmatpush.bf16.msra.mxu0 %v517
    %526 = vmatmul.bf16.gmra.mxu0 %v403
    %v527 = vpop.f32.mrf.mxu0
    %v528 = vadd.f32 %v479, %v527
    %v529 = vpop.f32.mrf.mxu0
    %v530 = vadd.f32 %v479, %v529
    %531 = vdwg.mxu0
    %vm532 = vcmp.gt.f32.partialorder %v528, 0.0
    %vm533 = vcmp.gt.f32.partialorder %v530, 0.0
    %v534 = vmul.f32 %v528, %v497
    %v535 = vmul.f32 %v530, %v497
    %v536 = vsel %vm532, %v528, %v534
    %v537 = vsel %vm533, %v530, %v535
    %538 = vst [vmem:[#allocation20] sm:$0xff] %v500
    %539 = vst [vmem:[#allocation20 + $0x8] sm:$0xff] %v501
    %540 = vst [vmem:[#allocation20 + $0x10] sm:$0xff] %v536
    %541 = vst [vmem:[#allocation20 + $0x18] sm:$0xff] %v537
    %v542 = vld [vmem:[#allocation11] sm:$0xff]
    %v543 = vld [vmem:[#allocation11 + $0x8] sm:$0xff]
    %v544 = vld [vmem:[#allocation11 + $0x10] sm:$0xff]
    %v545 = vld [vmem:[#allocation11 + $0x18] sm:$0xff]
    %v546 = vld [vmem:[#allocation11 + $0x20] sm:$0xff]
    %v547 = vld [vmem:[#allocation11 + $0x28] sm:$0xff]
    %v548 = vld [vmem:[#allocation11 + $0x30] sm:$0xff]
    %v549 = vld [vmem:[#allocation11 + $0x38] sm:$0xff]
    %v550 = vld [vmem:[#allocation11 + $0x40] sm:$0xff]
    %v551 = vld [vmem:[#allocation11 + $0x48] sm:$0xff]
    %v552 = vld [vmem:[#allocation11 + $0x50] sm:$0xff]
    %v553 = vld [vmem:[#allocation11 + $0x58] sm:$0xff]
    %v554 = vld [vmem:[#allocation11 + $0x60] sm:$0xff]
    %v555 = vld [vmem:[#allocation11 + $0x68] sm:$0xff]
    %v556 = vld [vmem:[#allocation11 + $0x70] sm:$0xff]
    %v557 = vld [vmem:[#allocation11 + $0x78] sm:$0xff]
    %v558 = vpack.c.bf16 %v501, %v500
    %v559 = vpack.c.bf16 %v543, %v542
    %v560 = vpack.c.bf16 %v545, %v544
    %v561 = vpack.c.bf16 %v547, %v546
    %v562 = vpack.c.bf16 %v549, %v548
    %v563 = vpack.c.bf16 %v551, %v550
    %v564 = vpack.c.bf16 %v553, %v552
    %v565 = vpack.c.bf16 %v555, %v554
    %v566 = vpack.c.bf16 %v557, %v556
    %567 = vmatpush.bf16.msra.mxu0 %v566
    %568 = vmatpush.bf16.msra.mxu0 %v565
    %569 = vmatpush.bf16.msra.mxu0 %v564
    %570 = vmatpush.bf16.msra.mxu0 %v563
    %571 = vmatpush.bf16.msra.mxu0 %v562
    %572 = vmatpush.bf16.msra.mxu0 %v561
    %573 = vmatpush.bf16.msra.mxu0 %v560
    %574 = vmatpush.bf16.msra.mxu0 %v559
    %575 = vmatmul.bf16.gmra.mxu0 %v558
    %v576 = vpop.f32.mrf.mxu0
    %v577 = vadd.f32 0.0, %v576
    %v578 = vpop.f32.mrf.mxu0
    %v579 = vadd.f32 0.0, %v578
    %580 = vdwg.mxu0
    %v581 = vpack.c.bf16 %v579, %v577
    %v582 = vld [vmem:[%s14] sm:$0x1]
    %v584 = vperm.slane %v582, 0
    %586 = vmatpush.bf16.msra.mxu0 0
    %587 = vmatpush.bf16.msra.mxu0 0
    %588 = vmatpush.bf16.msra.mxu0 0
    %589 = vmatpush.bf16.msra.mxu0 0
    %590 = vmatpush.bf16.msra.mxu0 0
    %591 = vmatpush.bf16.msra.mxu0 0
    %592 = vmatpush.bf16.msra.mxu0 0
    %593 = vmatpush.bf16.msra.mxu0 %v581
    %594 = vmatmul.bf16.gmra.mxu0 %v403
    %v595 = vpop.f32.mrf.mxu0
    %v596 = vadd.f32 %v584, %v595
    %v597 = vpop.f32.mrf.mxu0
    %v598 = vadd.f32 %v584, %v597
    %599 = vdwg.mxu0
    %vm600 = vcmp.gt.f32.partialorder %v596, 0.0
    %vm601 = vcmp.gt.f32.partialorder %v598, 0.0
    %v602 = vstv %s233
    %v603 = vmul.f32 %v596, %v602
    %v604 = vmul.f32 %v598, %v602
    %v605 = vsel %vm600, %v596, %v603
    %v606 = vsel %vm601, %v598, %v604
    %v607 = vld [vmem:[#allocation12] sm:$0xff]
    %v608 = vld [vmem:[#allocation12 + $0x8] sm:$0xff]
    %v609 = vld [vmem:[#allocation12 + $0x10] sm:$0xff]
    %v610 = vld [vmem:[#allocation12 + $0x18] sm:$0xff]
    %v611 = vld [vmem:[#allocation12 + $0x20] sm:$0xff]
    %v612 = vld [vmem:[#allocation12 + $0x28] sm:$0xff]
    %v613 = vld [vmem:[#allocation12 + $0x30] sm:$0xff]
    %v614 = vld [vmem:[#allocation12 + $0x38] sm:$0xff]
    %v615 = vld [vmem:[#allocation12 + $0x40] sm:$0xff]
    %v616 = vld [vmem:[#allocation12 + $0x48] sm:$0xff]
    %v617 = vld [vmem:[#allocation12 + $0x50] sm:$0xff]
    %v618 = vld [vmem:[#allocation12 + $0x58] sm:$0xff]
    %v619 = vld [vmem:[#allocation12 + $0x60] sm:$0xff]
    %v620 = vld [vmem:[#allocation12 + $0x68] sm:$0xff]
    %v621 = vld [vmem:[#allocation12 + $0x70] sm:$0xff]
    %v622 = vld [vmem:[#allocation12 + $0x78] sm:$0xff]
    %v623 = vpack.c.bf16 %v606, %v605
    %v624 = vpack.c.bf16 %v608, %v607
    %v625 = vpack.c.bf16 %v610, %v609
    %v626 = vpack.c.bf16 %v612, %v611
    %v627 = vpack.c.bf16 %v614, %v613
    %v628 = vpack.c.bf16 %v616, %v615
    %v629 = vpack.c.bf16 %v618, %v617
    %v630 = vpack.c.bf16 %v620, %v619
    %v631 = vpack.c.bf16 %v622, %v621
    %632 = vmatpush.bf16.msra.mxu0 %v631
    %633 = vmatpush.bf16.msra.mxu0 %v630
    %634 = vmatpush.bf16.msra.mxu0 %v629
    %635 = vmatpush.bf16.msra.mxu0 %v628
    %636 = vmatpush.bf16.msra.mxu0 %v627
    %637 = vmatpush.bf16.msra.mxu0 %v626
    %638 = vmatpush.bf16.msra.mxu0 %v625
    %639 = vmatpush.bf16.msra.mxu0 %v624
    %640 = vmatmul.bf16.gmra.mxu0 %v623
    %v641 = vpop.f32.mrf.mxu0
    %v642 = vadd.f32 0.0, %v641
    %v643 = vpop.f32.mrf.mxu0
    %v644 = vadd.f32 0.0, %v643
    %645 = vdwg.mxu0
    %v646 = vpack.c.bf16 %v644, %v642
    %v647 = vld [vmem:[%s16] sm:$0x1]
    %v649 = vperm.slane %v647, 0
    %651 = vmatpush.bf16.msra.mxu0 0
    %652 = vmatpush.bf16.msra.mxu0 0
    %653 = vmatpush.bf16.msra.mxu0 0
    %654 = vmatpush.bf16.msra.mxu0 0
    %655 = vmatpush.bf16.msra.mxu0 0
    %656 = vmatpush.bf16.msra.mxu0 0
    %657 = vmatpush.bf16.msra.mxu0 0
    %658 = vmatpush.bf16.msra.mxu0 %v646
    %659 = vmatmul.bf16.gmra.mxu0 %v403
    %v660 = vpop.f32.mrf.mxu0
    %v661 = vadd.f32 %v649, %v660
    %v662 = vpop.f32.mrf.mxu0
    %v663 = vadd.f32 %v649, %v662
    %664 = vdwg.mxu0
    %vm665 = vcmp.gt.f32.partialorder %v661, 0.0
    %vm666 = vcmp.gt.f32.partialorder %v663, 0.0
    %v667 = vstv %s234
    %v668 = vmul.f32 %v661, %v667
    %v669 = vmul.f32 %v663, %v667
    %v670 = vsel %vm665, %v661, %v668
    %v671 = vsel %vm666, %v663, %v669
    %v672 = vld [vmem:[#allocation14] sm:$0xff]
    %v673 = vld [vmem:[#allocation14 + $0x8] sm:$0xff]
    %v674 = vld [vmem:[#allocation14 + $0x10] sm:$0xff]
    %v675 = vld [vmem:[#allocation14 + $0x18] sm:$0xff]
    %v676 = vld [vmem:[#allocation14 + $0x20] sm:$0xff]
    %v677 = vld [vmem:[#allocation14 + $0x28] sm:$0xff]
    %v678 = vld [vmem:[#allocation14 + $0x30] sm:$0xff]
    %v679 = vld [vmem:[#allocation14 + $0x38] sm:$0xff]
    %v680 = vld [vmem:[#allocation14 + $0x40] sm:$0xff]
    %v681 = vld [vmem:[#allocation14 + $0x48] sm:$0xff]
    %v682 = vld [vmem:[#allocation14 + $0x50] sm:$0xff]
    %v683 = vld [vmem:[#allocation14 + $0x58] sm:$0xff]
    %v684 = vld [vmem:[#allocation14 + $0x60] sm:$0xff]
    %v685 = vld [vmem:[#allocation14 + $0x68] sm:$0xff]
    %v686 = vld [vmem:[#allocation14 + $0x70] sm:$0xff]
    %v687 = vld [vmem:[#allocation14 + $0x78] sm:$0xff]
    %v688 = vpack.c.bf16 %v673, %v672
    %v689 = vpack.c.bf16 %v675, %v674
    %v690 = vpack.c.bf16 %v677, %v676
    %v691 = vpack.c.bf16 %v679, %v678
    %v692 = vpack.c.bf16 %v681, %v680
    %v693 = vpack.c.bf16 %v683, %v682
    %v694 = vpack.c.bf16 %v685, %v684
    %v695 = vpack.c.bf16 %v687, %v686
    %v696 = vld [vmem:[%s18] sm:$0x1]
    %v697 = vld [vmem:[#allocation15] sm:$0xff]
    %v698 = vld [vmem:[#allocation15 + $0x8] sm:$0xff]
    %v699 = vld [vmem:[#allocation15 + $0x10] sm:$0xff]
    %v700 = vld [vmem:[#allocation15 + $0x18] sm:$0xff]
    %v701 = vld [vmem:[#allocation15 + $0x20] sm:$0xff]
    %v702 = vld [vmem:[#allocation15 + $0x28] sm:$0xff]
    %v703 = vld [vmem:[#allocation15 + $0x30] sm:$0xff]
    %v704 = vld [vmem:[#allocation15 + $0x38] sm:$0xff]
    %v705 = vld [vmem:[#allocation15 + $0x40] sm:$0xff]
    %v706 = vld [vmem:[#allocation15 + $0x48] sm:$0xff]
    %v707 = vld [vmem:[#allocation15 + $0x50] sm:$0xff]
    %v708 = vld [vmem:[#allocation15 + $0x58] sm:$0xff]
    %v709 = vld [vmem:[#allocation15 + $0x60] sm:$0xff]
    %v710 = vld [vmem:[#allocation15 + $0x68] sm:$0xff]
    %v711 = vld [vmem:[#allocation15 + $0x70] sm:$0xff]
    %v712 = vld [vmem:[#allocation15 + $0x78] sm:$0xff]
    %v713 = vpack.c.bf16 %v698, %v697
    %v714 = vpack.c.bf16 %v700, %v699
    %v715 = vpack.c.bf16 %v702, %v701
    %v716 = vpack.c.bf16 %v704, %v703
    %v717 = vpack.c.bf16 %v706, %v705
    %v718 = vpack.c.bf16 %v708, %v707
    %v719 = vpack.c.bf16 %v710, %v709
    %v720 = vpack.c.bf16 %v712, %v711
    %v721 = vld [vmem:[%s20] sm:$0x1]
    %v723 = vperm.slane %v696, 0
    %725 = vmatpush.bf16.msra.mxu0 %v695
    %726 = vmatpush.bf16.msra.mxu0 %v694
    %727 = vmatpush.bf16.msra.mxu0 %v693
    %728 = vmatpush.bf16.msra.mxu0 %v692
    %729 = vmatpush.bf16.msra.mxu0 %v691
    %730 = vmatpush.bf16.msra.mxu0 %v690
    %731 = vmatpush.bf16.msra.mxu0 %v689
    %732 = vmatpush.bf16.msra.mxu0 %v688
    %733 = vmatmul.bf16.gmra.mxu0 %v558
    %v734 = vpop.f32.mrf.mxu0
    %v735 = vadd.f32 %v723, %v734
    %v736 = vpop.f32.mrf.mxu0
    %v737 = vadd.f32 %v723, %v736
    %738 = vdwg.mxu0
    %v739 = vxor.u32 %v735, 2147483648
    %v740 = vxor.u32 %v737, 2147483648
    %v741 = vmul.f32 %v739, 1.442695
    %v742 = vpow.pop %v741
    %v743 = vmul.f32 %v740, 1.442695
    %v744 = vpow.pop %v743
    %v745 = vadd.f32 %v742, 1.0
    %v746 = vadd.f32 %v744, 1.0
    %v747 = vrcp.pop %v745
    %v748 = vmul.f32 %v745, %v747
    %v749 = vsub.f32 1.0, %v748
    %v750 = vmul.f32 %v747, %v749
    %v751 = vadd.f32 %v747, %v750
    %vm752 = vweird.f32 %v745
    %vm753 = vweird.f32 %v747
    %vm754 = vmor %vm752, %vm753
    %v755 = vsel %vm754, %v747, %v751
    %v756 = vand.u32 2147483647, %v745
    %vm757 = vcmp.eq.f32.partialorder %v756, 8.507059e+37
    %v758 = vand.u32 %v745, 2147483648
    %v759 = vor.u32 1.1754944e-38, %v758
    %v760 = vsel %vm757, %v759, %v755
    %v761 = vmul.f32 1.0, %v760
    %v762 = vrcp.pop %v746
    %v763 = vmul.f32 %v746, %v762
    %v764 = vsub.f32 1.0, %v763
    %v765 = vmul.f32 %v762, %v764
    %v766 = vadd.f32 %v762, %v765
    %vm767 = vweird.f32 %v746
    %vm768 = vweird.f32 %v762
    %vm769 = vmor %vm767, %vm768
    %v770 = vsel %vm769, %v762, %v766
    %v771 = vand.u32 2147483647, %v746
    %vm772 = vcmp.eq.f32.partialorder %v771, 8.507059e+37
    %v773 = vand.u32 %v746, 2147483648
    %v774 = vor.u32 1.1754944e-38, %v773
    %v775 = vsel %vm772, %v774, %v770
    %v776 = vmul.f32 1.0, %v775
    %v777 = vpack.c.bf16 %v776, %v761
    %v779 = vperm.slane %v721, 0
    %781 = vmatpush.bf16.msra.mxu0 %v720
    %782 = vmatpush.bf16.msra.mxu0 %v719
    %783 = vmatpush.bf16.msra.mxu0 %v718
    %784 = vmatpush.bf16.msra.mxu0 %v717
    %785 = vmatpush.bf16.msra.mxu0 %v716
    %786 = vmatpush.bf16.msra.mxu0 %v715
    %787 = vmatpush.bf16.msra.mxu0 %v714
    %788 = vmatpush.bf16.msra.mxu0 %v713
    %789 = vmatmul.bf16.gmra.mxu0 %v777
    %v790 = vpop.f32.mrf.mxu0
    %v791 = vadd.f32 %v779, %v790
    %v792 = vpop.f32.mrf.mxu0
    %v793 = vadd.f32 %v779, %v792
    %794 = vdwg.mxu0
    %v795 = vxor.u32 %v791, 2147483648
    %v796 = vxor.u32 %v793, 2147483648
    %v797 = vmul.f32 %v795, 1.442695
    %v798 = vpow.pop %v797
    %v799 = vmul.f32 %v796, 1.442695
    %v800 = vpow.pop %v799
    %v801 = vadd.f32 %v798, 1.0
    %v802 = vadd.f32 %v800, 1.0
    %v803 = vrcp.pop %v801
    %v804 = vmul.f32 %v801, %v803
    %v805 = vsub.f32 1.0, %v804
    %v806 = vmul.f32 %v803, %v805
    %v807 = vadd.f32 %v803, %v806
    %vm808 = vweird.f32 %v801
    %vm809 = vweird.f32 %v803
    %vm810 = vmor %vm808, %vm809
    %v811 = vsel %vm810, %v803, %v807
    %v812 = vand.u32 2147483647, %v801
    %vm813 = vcmp.eq.f32.partialorder %v812, 8.507059e+37
    %v814 = vand.u32 %v801, 2147483648
    %v815 = vor.u32 1.1754944e-38, %v814
    %v816 = vsel %vm813, %v815, %v811
    %v817 = vmul.f32 1.0, %v816
    %v818 = vrcp.pop %v802
    %v819 = vmul.f32 %v802, %v818
    %v820 = vsub.f32 1.0, %v819
    %v821 = vmul.f32 %v818, %v820
    %v822 = vadd.f32 %v818, %v821
    %vm823 = vweird.f32 %v802
    %vm824 = vweird.f32 %v818
    %vm825 = vmor %vm823, %vm824
    %v826 = vsel %vm825, %v818, %v822
    %v827 = vand.u32 2147483647, %v802
    %vm828 = vcmp.eq.f32.partialorder %v827, 8.507059e+37
    %v829 = vand.u32 %v802, 2147483648
    %v830 = vor.u32 1.1754944e-38, %v829
    %v831 = vsel %vm828, %v830, %v826
    %v832 = vmul.f32 1.0, %v831
    %v833 = vpack.c.bf16 %v537, %v536
    %834 = vmatpush.bf16.msra.mxu0 %v695
    %835 = vmatpush.bf16.msra.mxu0 %v694
    %836 = vmatpush.bf16.msra.mxu0 %v693
    %837 = vmatpush.bf16.msra.mxu0 %v692
    %838 = vmatpush.bf16.msra.mxu0 %v691
    %839 = vmatpush.bf16.msra.mxu0 %v690
    %840 = vmatpush.bf16.msra.mxu0 %v689
    %841 = vmatpush.bf16.msra.mxu0 %v688
    %842 = vmatmul.bf16.gmra.mxu0 %v833
    %v843 = vpop.f32.mrf.mxu0
    %v844 = vadd.f32 %v723, %v843
    %v845 = vpop.f32.mrf.mxu0
    %v846 = vadd.f32 %v723, %v845
    %847 = vdwg.mxu0
    %v848 = vxor.u32 %v844, 2147483648
    %v849 = vxor.u32 %v846, 2147483648
    %v850 = vmul.f32 %v848, 1.442695
    %v851 = vpow.pop %v850
    %v852 = vmul.f32 %v849, 1.442695
    %v853 = vpow.pop %v852
    %v854 = vadd.f32 %v851, 1.0
    %v855 = vadd.f32 %v853, 1.0
    %v856 = vrcp.pop %v854
    %v857 = vmul.f32 %v854, %v856
    %v858 = vsub.f32 1.0, %v857
    %v859 = vmul.f32 %v856, %v858
    %v860 = vadd.f32 %v856, %v859
    %vm861 = vweird.f32 %v854
    %vm862 = vweird.f32 %v856
    %vm863 = vmor %vm861, %vm862
    %v864 = vsel %vm863, %v856, %v860
    %v865 = vand.u32 2147483647, %v854
    %vm866 = vcmp.eq.f32.partialorder %v865, 8.507059e+37
    %v867 = vand.u32 %v854, 2147483648
    %v868 = vor.u32 1.1754944e-38, %v867
    %v869 = vsel %vm866, %v868, %v864
    %v870 = vmul.f32 1.0, %v869
    %v871 = vrcp.pop %v855
    %v872 = vmul.f32 %v855, %v871
    %v873 = vsub.f32 1.0, %v872
    %v874 = vmul.f32 %v871, %v873
    %v875 = vadd.f32 %v871, %v874
    %vm876 = vweird.f32 %v855
    %vm877 = vweird.f32 %v871
    %vm878 = vmor %vm876, %vm877
    %v879 = vsel %vm878, %v871, %v875
    %v880 = vand.u32 2147483647, %v855
    %vm881 = vcmp.eq.f32.partialorder %v880, 8.507059e+37
    %v882 = vand.u32 %v855, 2147483648
    %v883 = vor.u32 1.1754944e-38, %v882
    %v884 = vsel %vm881, %v883, %v879
    %v885 = vmul.f32 1.0, %v884
    %v886 = vpack.c.bf16 %v885, %v870
    %887 = vmatpush.bf16.msra.mxu0 %v720
    %888 = vmatpush.bf16.msra.mxu0 %v719
    %889 = vmatpush.bf16.msra.mxu0 %v718
    %890 = vmatpush.bf16.msra.mxu0 %v717
    %891 = vmatpush.bf16.msra.mxu0 %v716
    %892 = vmatpush.bf16.msra.mxu0 %v715
    %893 = vmatpush.bf16.msra.mxu0 %v714
    %894 = vmatpush.bf16.msra.mxu0 %v713
    %895 = vmatmul.bf16.gmra.mxu0 %v886
    %v896 = vpop.f32.mrf.mxu0
    %v897 = vadd.f32 %v779, %v896
    %v898 = vpop.f32.mrf.mxu0
    %v899 = vadd.f32 %v779, %v898
    %900 = vdwg.mxu0
    %v901 = vxor.u32 %v897, 2147483648
    %v902 = vxor.u32 %v899, 2147483648
    %v903 = vmul.f32 %v901, 1.442695
    %v904 = vpow.pop %v903
    %v905 = vmul.f32 %v902, 1.442695
    %v906 = vpow.pop %v905
    %v907 = vadd.f32 %v904, 1.0
    %v908 = vadd.f32 %v906, 1.0
    %v909 = vrcp.pop %v907
    %v910 = vmul.f32 %v907, %v909
    %v911 = vsub.f32 1.0, %v910
    %v912 = vmul.f32 %v909, %v911
    %v913 = vadd.f32 %v909, %v912
    %vm914 = vweird.f32 %v907
    %vm915 = vweird.f32 %v909
    %vm916 = vmor %vm914, %vm915
    %v917 = vsel %vm916, %v909, %v913
    %v918 = vand.u32 2147483647, %v907
    %vm919 = vcmp.eq.f32.partialorder %v918, 8.507059e+37
    %v920 = vand.u32 %v907, 2147483648
    %v921 = vor.u32 1.1754944e-38, %v920
    %v922 = vsel %vm919, %v921, %v917
    %v923 = vmul.f32 1.0, %v922
    %v924 = vrcp.pop %v908
    %v925 = vmul.f32 %v908, %v924
    %v926 = vsub.f32 1.0, %v925
    %v927 = vmul.f32 %v924, %v926
    %v928 = vadd.f32 %v924, %v927
    %vm929 = vweird.f32 %v908
    %vm930 = vweird.f32 %v924
    %vm931 = vmor %vm929, %vm930
    %v932 = vsel %vm931, %v924, %v928
    %v933 = vand.u32 2147483647, %v908
    %vm934 = vcmp.eq.f32.partialorder %v933, 8.507059e+37
    %v935 = vand.u32 %v908, 2147483648
    %v936 = vor.u32 1.1754944e-38, %v935
    %v937 = vsel %vm934, %v936, %v932
    %v938 = vmul.f32 1.0, %v937
    %939 = vst [vmem:[%s24] sm:$0xff] %v817
    %940 = vst [vmem:[%s24 + $0x8] sm:$0xff] %v832
    %941 = vst [vmem:[%s24 + $0x10] sm:$0xff] %v923
    %942 = vst [vmem:[%s24 + $0x18] sm:$0xff] %v938
    %v943 = vsub.f32 1.0, %v923
    %v944 = vsub.f32 1.0, %v938
    %v945 = vlog2.pop %v943
    %v946 = vmul.f32 %v945, 0.6931472
    %v947 = vlog2.pop %v944
    %v948 = vmul.f32 %v947, 0.6931472
    %v949 = vmax.f32 %v946, -100.0
    %v950 = vmax.f32 %v948, -100.0
    %v951 = vsub.f32 0.0, %v949
    %v952 = vsub.f32 0.0, %v950
    %v953 = vld [vmem:[%s4] sm:$0xff]
    %v954 = vld [vmem:[%s4 + $0x8] sm:$0xff]
    %v955 = vmul.f32 %v951, %v953
    %v956 = vmul.f32 %v952, %v954
    %vm957 = vcmask 7168
    %v958 = vsel %vm957, %v955, 0.0
    %v959 = vsel %vm957, %v956, 0.0
    %v960 = vadd.f32 %v958, %v959
    %v961 = vrot.slane %v960, 4
    %v962 = vadd.f32 %v960, %v961
    %v963 = vrot.slane %v962, 2
    %v964 = vadd.f32 %v962, %v963
    %v965 = vrot.slane %v964, 1
    %v966 = vadd.f32 %v964, %v965
    %v967 = vstv %s236
    %v968 = vmul.f32 %v966, %v967
    %vm969 = vcmask 0
    %970 = vst.msk [vmem:[#allocation23] sm:$0x1] %vm969, %v968
    %v971 = vsub.f32 %v237, %v670
    %v972 = vsub.f32 %v238, %v671
    %v973 = vmul.f32 %v971, %v971
    %v974 = vmul.f32 %v972, %v972
    %975 = vadd.xlane.f32.xlu0 %v973
    %v976 = vpop.xlane.xlu0 %975
    %977 = vadd.xlane.f32.xlu0 %v974
    %v978 = vpop.xlane.xlu0 %977
    %v979 = vrsqrt.pop %v976
    %v980 = vmul.f32 %v979, %v976
    %v981 = vmul.f32 %v980, %v979
    %v982 = vmul.f32 0.5, %v981
    %v983 = vsub.f32 1.5, %v982
    %v984 = vmul.f32 %v979, %v983
    %v985 = vmul.f32 %v976, %v984
    %vm986 = vcmp.eq.f32.partialorder %v976, inf
    %v987 = vsel %vm986, %v976, %v985
    %vm988 = vcmp.eq.f32.partialorder %v976, 0.0
    %v989 = vand.u32 %v976, 2147483648
    %v990 = vsel %vm988, %v989, %v987
    %v991 = vrsqrt.pop %v978
    %v992 = vmul.f32 %v991, %v978
    %v993 = vmul.f32 %v992, %v991
    %v994 = vmul.f32 0.5, %v993
    %v995 = vsub.f32 1.5, %v994
    %v996 = vmul.f32 %v991, %v995
    %v997 = vmul.f32 %v978, %v996
    %vm998 = vcmp.eq.f32.partialorder %v978, inf
    %v999 = vsel %vm998, %v978, %v997
    %vm1000 = vcmp.eq.f32.partialorder %v978, 0.0
    %v1001 = vand.u32 %v978, 2147483648
    %v1002 = vsel %vm1000, %v1001, %v999
    %v1003 = vld [vmem:[%s3] sm:$0xff]
    %v1004 = vld [vmem:[%s3 + $0x8] sm:$0xff]
    %v1005 = vmul.f32 %v990, %v1003
    %v1006 = vmul.f32 %v1002, %v1004
    %v1007 = vsel %vm957, %v1005, 0.0
    %v1008 = vsel %vm957, %v1006, 0.0
    %v1009 = vadd.f32 %v1007, %v1008
    %v1010 = vrot.slane %v1009, 4
    %v1011 = vadd.f32 %v1009, %v1010
    %v1012 = vrot.slane %v1011, 2
    %v1013 = vadd.f32 %v1011, %v1012
    %v1014 = vrot.slane %v1013, 1
    %v1015 = vadd.f32 %v1013, %v1014
    %v1016 = vstv %s235
    %v1017 = vmul.f32 %v1015, %v1016
    %1018 = vst.msk [vmem:[#allocation21] sm:$0x1] %vm969, %v1017
    // Predicated region
    $region134: #{model_forward.1} parent=1 // pred_check
      _
    $region135: #{model_forward.1} parent=1 // pred_check_branch
      %1020 = sbr.rel (0) target = $region137
    $region136: #{model_forward.1} parent=1 // pred_region
      %1022 = vsyncadd [#allocation4], 0
      %s1023 = sshll.u32 [#allocation20], 4
      %s1024 = int_to_ptr.vmem [resolvable:$true] %s1023
      %s1025 = sshll.u32 %s23, 4
      %s1026 = int_to_ptr.hbm [resolvable:$true] %s1025
      %1031 = dma.vmem_to_hbm [thread:$0]  %s1024, 512, %s1026, [#allocation4], 128, 128, 8
    $region137: #{model_forward.1} parent=1 // pred_fallthru
      _
    // Predicated region
    $region138: #{model_forward.1} parent=1 // pred_check
      _
    $region139: #{model_forward.1} parent=1 // pred_check_branch
      %1033 = sbr.rel (0) target = $region141
    $region140: #{model_forward.1} parent=1 // pred_region
      _
    $region141: #{model_forward.1} parent=1 // pred_fallthru
      _
    // Predicated region
    $region142: #{model_forward.1} parent=1 // pred_check
      _
    $region143: #{model_forward.1} parent=1 // pred_check_branch
      %1035 = sbr.rel (0) target = $region145
    $region144: #{model_forward.1} parent=1 // pred_region
      %1037 = vsyncadd [#allocation22], 0
      %s1039 = sshll.u32 [#allocation21], 4
      %s1040 = int_to_ptr.vmem [resolvable:$true] %s1039
      %s1041 = sshll.u32 %s25, 4
      %s1042 = int_to_ptr.hbm [resolvable:$true] %s1041
      %1044 = dma.vmem_to_hbm [thread:$0]  %s1040, 16, %s1042, [#allocation22]
    $region145: #{model_forward.1} parent=1 // pred_fallthru
      _
    // Predicated region
    $region146: #{model_forward.1} parent=1 // pred_check
      _
    $region147: #{model_forward.1} parent=1 // pred_check_branch
      %1046 = sbr.rel (0) target = $region149
    $region148: #{model_forward.1} parent=1 // pred_region
      %1048 = vsyncadd [#allocation22], 0
      %s1050 = sshll.u32 [#allocation23], 4
      %s1051 = int_to_ptr.vmem [resolvable:$true] %s1050
      %s1052 = sshll.u32 %s26, 4
      %s1053 = int_to_ptr.hbm [resolvable:$true] %s1052
      %1055 = dma.vmem_to_hbm [thread:$0]  %s1051, 16, %s1053, [#allocation22]
    $region149: #{model_forward.1} parent=1 // pred_fallthru
      _
    // Predicated region
    $region150: #{model_forward.1} parent=1 // pred_check
      _
    $region151: #{model_forward.1} parent=1 // pred_check_branch
      %1057 = sbr.rel (0) target = $region153
    $region152: #{model_forward.1} parent=1 // pred_region
      %1059 = dma.done [#allocation4], 512
    $region153: #{model_forward.1} parent=1 // pred_fallthru
      _
    // Predicated region
    $region154: #{model_forward.1} parent=1 // pred_check
      _
    $region155: #{model_forward.1} parent=1 // pred_check_branch
      %1061 = sbr.rel (0) target = $region157
    $region156: #{model_forward.1} parent=1 // pred_region
      _
    $region157: #{model_forward.1} parent=1 // pred_fallthru
      _
    // Predicated region
    $region158: #{model_forward.1} parent=1 // pred_check
      _
    $region159: #{model_forward.1} parent=1 // pred_check_branch
      %1063 = sbr.rel (0) target = $region161
    $region160: #{model_forward.1} parent=1 // pred_region
      %1065 = dma.done [#allocation22], 16
    $region161: #{model_forward.1} parent=1 // pred_fallthru
      _
    // Predicated region
    $region162: #{model_forward.1} parent=1 // pred_check
      _
    $region163: #{model_forward.1} parent=1 // pred_check_branch
      %1067 = sbr.rel (0) target = $region165
    $region164: #{model_forward.1} parent=1 // pred_region
      %1069 = dma.done [#allocation22], 16
    $region165: #{model_forward.1} parent=1 // pred_fallthru
      _
    %1070 = vsyncpa [#allocation3], 1
    %1071 = vsyncpa [#allocation7], 1
    %1072 = vsyncpa [#allocation10], 1
    %1073 = vsyncpa [#allocation13], 1
    %1074 = vsyncpa [#allocation16], 1
    %1075 = vsyncpa [#allocation4], 1
    %1076 = vsyncpa [#allocation22], 1
    %1077 = vsyncpa [#allocation5], 1
    %1078 = vsyncpa [#allocation19], 1

</llo_original>
